<compile_context>
chip_gen: v7x
topology: tpu7x:2x2x1
jax: 0.10.0
libtpu: 0.0.40
codegen_flags: <defaults>
</compile_context>

<pallas_src>
import functools

import jax
import jax.numpy as jnp
from jax.experimental import pallas as pl
from jax.experimental.pallas import tpu as pltpu


def _round_up(x, m):
    return ((x + m - 1) // m) * m


def _cdiv(a, b):
    return (a + b - 1) // b


# -----------------------------------------------------------------------------
# Kernel
# -----------------------------------------------------------------------------
def _ff_shared_kernel(action_size,
                      x_ref,
                      w1_ref, b1_ref,      # shared layer 1: D -> 512   (bf16 W)
                      w2_ref, b2_ref,      # shared layer 2: 512 -> 256 (bf16 W)
                      wh_ref, bh_ref,      # fused head hidden: 256 -> 512 ([mu|v])
                      wo_ref, bo_ref,      # fused head output: 512 -> OUT_PAD
                      out_ref):
    # Activations stay f32 for the epilogue (bias / ReLU / softplus on VPU+EUP,
    # v5e has no bf16 VPU datapath); operands are cast to bf16 right at each
    # dot so the MXU runs single-pass bf16 with an f32 accumulator.
    x = x_ref[...].astype(jnp.bfloat16)                              # (TN, D)

    # shared_mlp: ReLU after each layer (MlpModel with output_size=None)
    f = jnp.dot(x, w1_ref[...], preferred_element_type=jnp.float32) + b1_ref[...]
    f = jnp.maximum(f, 0.0)
    f = jnp.dot(f.astype(jnp.bfloat16), w2_ref[...],
                preferred_element_type=jnp.float32) + b2_ref[...]
    f = jnp.maximum(f, 0.0)                                          # (TN, 256)

    # fused head hidden layers (mu_head hidden | v_head hidden), shared input
    h = jnp.dot(f.astype(jnp.bfloat16), wh_ref[...],
                preferred_element_type=jnp.float32) + bh_ref[...]
    h = jnp.maximum(h, 0.0)                                          # (TN, 512)

    # fused block-sparse output matmul -> lane-dense (TN, OUT_PAD) slab:
    #   cols [0, A)       : mu
    #   cols [A, 2A)      : covariance logits (softplus below)
    #   col  2A           : value
    #   cols (2A, OUT_PAD): zero padding
    o = jnp.dot(h.astype(jnp.bfloat16), wo_ref[...],
                preferred_element_type=jnp.float32) + bo_ref[...]

    col = jax.lax.broadcasted_iota(jnp.int32, o.shape, 1)
    cov_mask = (col >= action_size) & (col < 2 * action_size)
    # numerically-stable softplus: max(x,0) + log(1 + exp(-|x|)); exp/log land
    # in the EUP slot (free filler under MXU cycles).
    sp = jnp.maximum(o, 0.0) + jnp.log(1.0 + jnp.exp(-jnp.abs(o)))
    out_ref[...] = jnp.where(cov_mask, sp, o)


# -----------------------------------------------------------------------------
# Jitted 2-D forward (rows = T*B)
# -----------------------------------------------------------------------------
@functools.partial(jax.jit, static_argnums=(2,))
def _ff_shared_forward_2d(obs_flat, params, action_size):
    n, d = obs_flat.shape
    w1, b1, w2, b2, wh, bh, wo, bo = params
    h1 = w1.shape[1]              # 512
    h2 = w2.shape[1]              # 256
    hh = wh.shape[1]              # 512 (fused head hidden)
    out_pad = wo.shape[1]         # 128 (lane-dense output slab)

    # Balanced row tiling: ~512-row tiles, but >=2 grid steps once n > 256 so
    # both v7x TensorCores get work; avoids the up-to-2x overshoot of
    # round_up(n, tile).
    if n <= 256:
        g = 1
    else:
        g = max(_cdiv(n, 512), 2)
    tn = _round_up(_cdiv(n, g), 8)
    n_pad = g * tn

    x = obs_flat.astype(jnp.float32)
    if n_pad != n:
        x = jnp.pad(x, ((0, n_pad - n), (0, 0)))     # cheap row-only pad

    param_bytes = (2 * (d * h1 + h1 * h2 + h2 * hh + hh * out_pad)   # bf16 weights
                   + 4 * (h1 + h2 + hh + out_pad))                   # f32 biases
    cost = pl.CostEstimate(
        flops=2 * n_pad * (d * h1 + h1 * h2 + h2 * hh + hh * out_pad),
        transcendentals=2 * n_pad * out_pad,
        bytes_accessed=4 * n_pad * (d + out_pad) + param_bytes,
    )

    in_specs = [pl.BlockSpec((tn, d), lambda i: (i, 0))]            # obs tile
    in_specs += [pl.BlockSpec(p.shape, lambda i: (0, 0))            # VMEM-resident
                 for p in params]
    out_specs = pl.BlockSpec((tn, out_pad), lambda i: (i, 0))

    out = pl.pallas_call(
        functools.partial(_ff_shared_kernel, action_size),
        out_shape=jax.ShapeDtypeStruct((n_pad, out_pad), jnp.float32),
        grid=(g,),
        in_specs=in_specs,
        out_specs=out_specs,
        compiler_params=pltpu.CompilerParams(
            dimension_semantics=("parallel",),
            vmem_limit_bytes=32 * 1024 * 1024,
        ),
        cost_estimate=cost,
    )(x, *params)

    mu = out[:n, :action_size]
    cov = out[:n, action_size:2 * action_size]
    v = out[:n, 2 * action_size]
    return mu, cov, v


# -----------------------------------------------------------------------------
# Parameter init (matches torch.nn.Linear default: U(-1/sqrt(fan_in), +))
# -----------------------------------------------------------------------------
def _torch_linear_init(key, fan_in, fan_out):
    kw, kb = jax.random.split(key)
    bound = 1.0 / (float(fan_in) ** 0.5)
    w = jax.random.uniform(kw, (fan_in, fan_out), jnp.float32, -bound, bound)
    b = jax.random.uniform(kb, (1, fan_out), jnp.float32, -bound, bound)
    return w, b


class FfSharedModelPallas:
    SHARED_H1 = 512
    SHARED_FEATURES = 256
    HEAD_HIDDEN = 256

    def __init__(self, observation_shape, action_size, hidden_sizes=None,
                 linear_value_output=True, full_covariance=False,
                 layer_norm=False, key=None):
        assert not full_covariance, "TODO(synk): full_covariance not implemented"
        assert not layer_norm, "TODO(synk): layer_norm branch not implemented"
        assert linear_value_output, "TODO(synk): non-linear value head not implemented"

        self._obs_ndim = len(observation_shape)
        self.action_size = int(action_size)
        self.input_size = 1
        for dd in observation_shape:
            self.input_size *= int(dd)
        self.out_padded = _round_up(2 * self.action_size + 1, 128)

        key = key if key is not None else jax.random.PRNGKey(0)
        ks = jax.random.split(key, 6)
        a2 = 2 * self.action_size

        # raw (unfused, f32) parameters — also used by the pure-JAX reference
        w1, b1 = _torch_linear_init(ks[0], self.input_size, self.SHARED_H1)
        w2, b2 = _torch_linear_init(ks[1], self.SHARED_H1, self.SHARED_FEATURES)
        wmh, bmh = _torch_linear_init(ks[2], self.SHARED_FEATURES, self.HEAD_HIDDEN)
        wmo, bmo = _torch_linear_init(ks[3], self.HEAD_HIDDEN, a2)
        wvh, bvh = _torch_linear_init(ks[4], self.SHARED_FEATURES, self.HEAD_HIDDEN)
        wvo, bvo = _torch_linear_init(ks[5], self.HEAD_HIDDEN, 1)
        self.raw_params = dict(w1=w1, b1=b1, w2=w2, b2=b2,
                               wmh=wmh, bmh=bmh, wmo=wmo, bmo=bmo,
                               wvh=wvh, bvh=bvh, wvo=wvo, bvo=bvo)

        # --- kernel parameters: fused heads, bf16 weights, f32 biases ---
        # fused head hidden layer (shared input -> [mu_hidden | v_hidden])
        wh = jnp.concatenate([wmh, wvh], axis=1)                 # (256, 512)
        bh = jnp.concatenate([bmh, bvh], axis=1)                 # (1, 512)
        # fused block-sparse output layer -> lane-dense 128-wide slab
        wo = jnp.zeros((2 * self.HEAD_HIDDEN, self.out_padded), jnp.float32)
        wo = wo.at[:self.HEAD_HIDDEN, :a2].set(wmo)              # mu/cov columns
        wo = wo.at[self.HEAD_HIDDEN:, a2:a2 + 1].set(wvo)        # value column
        bo = jnp.zeros((1, self.out_padded), jnp.float32)
        bo = bo.at[:, :a2].set(bmo)
        bo = bo.at[:, a2:a2 + 1].set(bvo)

        self.params = (w1.astype(jnp.bfloat16), b1,
                       w2.astype(jnp.bfloat16), b2,
                       wh.astype(jnp.bfloat16), bh,
                       wo.astype(jnp.bfloat16), bo)

    def forward(self, observation, prev_action=None, prev_reward=None,
                init_rnn_state=None):
        lead_dim = observation.ndim - self._obs_ndim
        assert lead_dim in (0, 1, 2)
        if lead_dim == 2:
            T, B = int(observation.shape[0]), int(observation.shape[1])
        elif lead_dim == 1:
            T, B = 1, int(observation.shape[0])
        else:
            T, B = 1, 1
        lead_shape = observation.shape[:lead_dim]

        obs_flat = observation.reshape(T * B, self.input_size)
        mu, cov, v = _ff_shared_forward_2d(obs_flat, self.params, self.action_size)

        mu = mu.reshape(lead_shape + (self.action_size,))
        cov = cov.reshape(lead_shape + (self.action_size,))
        v = v.reshape(lead_shape)
        rnn_state = jnp.zeros((1, B, 1), jnp.float32)  # parity with the module
        return mu, cov, v, rnn_state


# -----------------------------------------------------------------------------
# Pure-JAX reference (uses the raw, unfused f32 parameters)
# -----------------------------------------------------------------------------
def _reference_forward(model, observation):
    lead_dim = observation.ndim - model._obs_ndim
    lead_shape = observation.shape[:lead_dim]
    x = observation.reshape(-1, model.input_size).astype(jnp.float32)
    r = model.raw_params
    hp = jax.lax.Precision.HIGHEST
    f = jnp.maximum(jnp.dot(x, r["w1"], precision=hp) + r["b1"], 0.0)
    f = jnp.maximum(jnp.dot(f, r["w2"], precision=hp) + r["b2"], 0.0)
    hm = jnp.maximum(jnp.dot(f, r["wmh"], precision=hp) + r["bmh"], 0.0)
    act = jnp.dot(hm, r["wmo"], precision=hp) + r["bmo"]
    hv = jnp.maximum(jnp.dot(f, r["wvh"], precision=hp) + r["bvh"], 0.0)
    v = (jnp.dot(hv, r["wvo"], precision=hp) + r["bvo"])[:, 0]
    A = model.action_size
    mu = act[:, :A]
    cov = jnp.log(1.0 + jnp.exp(act[:, A:2 * A]))
    return (mu.reshape(lead_shape + (A,)),
            cov.reshape(lead_shape + (A,)),
            v.reshape(lead_shape))


if __name__ == "__main__":
    key = jax.random.PRNGKey(0)
    k_obs, k_params = jax.random.split(key)

    # Small shapes consistent with the module: leading dims [T, B] = [8, 2],
    # observation_shape = (16,), action_size = 4 (hidden sizes are fixed by
    # the module at 512 / 256 / 256).
    T, B = 8, 2
    observation_shape = (16,)
    action_size = 4

    observation = jax.random.normal(k_obs, (T, B) + observation_shape, jnp.float32)
    prev_action = jnp.zeros((T, B, action_size), jnp.float32)   # unused (parity)
    prev_reward = jnp.zeros((T, B), jnp.float32)                # unused (parity)

    model = FfSharedModelPallas(observation_shape, action_size, key=k_params)

    mu, cov, v, rnn_state = model.forward(observation, prev_action, prev_reward)
    mu = jax.block_until_ready(mu)
    cov = jax.block_until_ready(cov)
    v = jax.block_until_ready(v)
    rnn_state = jax.block_until_ready(rnn_state)

    # sanity check against pure-JAX f32 reference (bf16 MXU operands -> ~1e-2 tol)
    ref_mu, ref_cov, ref_v = _reference_forward(model, observation)
    assert mu.shape == (T, B, action_size)
    assert cov.shape == (T, B, action_size)
    assert v.shape == (T, B)
    assert rnn_state.shape == (1, B, 1)
    assert jnp.allclose(mu, ref_mu, atol=1e-2, rtol=1e-2)
    assert jnp.allclose(cov, ref_cov, atol=1e-2, rtol=1e-2)
    assert jnp.allclose(v, ref_v, atol=1e-2, rtol=1e-2)
    assert bool(jnp.all(cov > 0.0))            # softplus output must be positive
    assert bool(jnp.all(rnn_state == 0.0))

    print("KERNEL_OK")
</pallas_src>

<mosaic_0001>
module attributes {stable_mosaic.version = 11 : i64} {
  func.func @_ff_shared_kernel(%arg0: i32, %arg1: memref<16x16xf32, #tpu.memory_space<vmem>>, %arg2: memref<16x512xbf16, #tpu.memory_space<vmem>>, %arg3: memref<1x512xf32, #tpu.memory_space<vmem>>, %arg4: memref<512x256xbf16, #tpu.memory_space<vmem>>, %arg5: memref<1x256xf32, #tpu.memory_space<vmem>>, %arg6: memref<256x512xbf16, #tpu.memory_space<vmem>>, %arg7: memref<1x512xf32, #tpu.memory_space<vmem>>, %arg8: memref<512x128xbf16, #tpu.memory_space<vmem>>, %arg9: memref<1x128xf32, #tpu.memory_space<vmem>>, %arg10: memref<16x128xf32, #tpu.memory_space<vmem>>) attributes {dimension_semantics = [#tpu.dimension_semantics<parallel>], iteration_bounds = array<i64: 1>, scalar_prefetch = 0 : i64, scratch_operands = 0 : i64, tpu.core_type = #tpu.core_type<tc>, window_params = [{transform_indices = @transform_0, window_bounds = array<i64: 16, 16>}, {pipeline_mode = #tpu.pipeline_mode<synchronous>, transform_indices = @transform_1, window_bounds = array<i64: 16, 512>}, {pipeline_mode = #tpu.pipeline_mode<synchronous>, transform_indices = @transform_2, window_bounds = array<i64: 1, 512>}, {pipeline_mode = #tpu.pipeline_mode<synchronous>, transform_indices = @transform_3, window_bounds = array<i64: 512, 256>}, {pipeline_mode = #tpu.pipeline_mode<synchronous>, transform_indices = @transform_4, window_bounds = array<i64: 1, 256>}, {pipeline_mode = #tpu.pipeline_mode<synchronous>, transform_indices = @transform_5, window_bounds = array<i64: 256, 512>}, {pipeline_mode = #tpu.pipeline_mode<synchronous>, transform_indices = @transform_6, window_bounds = array<i64: 1, 512>}, {pipeline_mode = #tpu.pipeline_mode<synchronous>, transform_indices = @transform_7, window_bounds = array<i64: 512, 128>}, {pipeline_mode = #tpu.pipeline_mode<synchronous>, transform_indices = @transform_8, window_bounds = array<i64: 1, 128>}, {transform_indices = @transform_9, window_bounds = array<i64: 16, 128>}]} {
    %c0 = arith.constant 0 : index
    %c0_0 = arith.constant 0 : index
    %0 = vector.load %arg1[%c0, %c0_0] : memref<16x16xf32, #tpu.memory_space<vmem>>, vector<16x16xf32>
    %1 = arith.truncf %0 : vector<16x16xf32> to vector<16x16xbf16>
    %c0_1 = arith.constant 0 : index
    %c0_2 = arith.constant 0 : index
    %2 = vector.load %arg2[%c0_1, %c0_2] : memref<16x512xbf16, #tpu.memory_space<vmem>>, vector<16x512xbf16>
    %cst = arith.constant dense<0.000000e+00> : vector<16x512xf32>
    %3 = tpu.matmul %1, %2, %cst {dimension_numbers = #tpu.dot_dimension_numbers<[1], [0], [0], [1], [0, 0, 1, 1], [], []>} : vector<16x16xbf16>, vector<16x512xbf16>, vector<16x512xf32> -> vector<16x512xf32>
    %c0_3 = arith.constant 0 : index
    %c0_4 = arith.constant 0 : index
    %4 = vector.load %arg3[%c0_3, %c0_4] : memref<1x512xf32, #tpu.memory_space<vmem>>, vector<1x512xf32>
    %5 = vector.broadcast %4 : vector<1x512xf32> to vector<16x512xf32>
    %6 = arith.addf %3, %5 : vector<16x512xf32>
    %cst_5 = arith.constant 0.000000e+00 : f32
    %7 = vector.broadcast %cst_5 : f32 to vector<16x512xf32>
    %8 = arith.maximumf %6, %7 : vector<16x512xf32>
    %9 = arith.truncf %8 : vector<16x512xf32> to vector<16x512xbf16>
    %c0_6 = arith.constant 0 : index
    %c0_7 = arith.constant 0 : index
    %10 = vector.load %arg4[%c0_6, %c0_7] : memref<512x256xbf16, #tpu.memory_space<vmem>>, vector<512x256xbf16>
    %cst_8 = arith.constant dense<0.000000e+00> : vector<16x256xf32>
    %11 = tpu.matmul %9, %10, %cst_8 {dimension_numbers = #tpu.dot_dimension_numbers<[1], [0], [0], [1], [0, 0, 1, 1], [], []>} : vector<16x512xbf16>, vector<512x256xbf16>, vector<16x256xf32> -> vector<16x256xf32>
    %c0_9 = arith.constant 0 : index
    %c0_10 = arith.constant 0 : index
    %12 = vector.load %arg5[%c0_9, %c0_10] : memref<1x256xf32, #tpu.memory_space<vmem>>, vector<1x256xf32>
    %13 = vector.broadcast %12 : vector<1x256xf32> to vector<16x256xf32>
    %14 = arith.addf %11, %13 : vector<16x256xf32>
    %cst_11 = arith.constant 0.000000e+00 : f32
    %15 = vector.broadcast %cst_11 : f32 to vector<16x256xf32>
    %16 = arith.maximumf %14, %15 : vector<16x256xf32>
    %17 = arith.truncf %16 : vector<16x256xf32> to vector<16x256xbf16>
    %c0_12 = arith.constant 0 : index
    %c0_13 = arith.constant 0 : index
    %18 = vector.load %arg6[%c0_12, %c0_13] : memref<256x512xbf16, #tpu.memory_space<vmem>>, vector<256x512xbf16>
    %cst_14 = arith.constant dense<0.000000e+00> : vector<16x512xf32>
    %19 = tpu.matmul %17, %18, %cst_14 {dimension_numbers = #tpu.dot_dimension_numbers<[1], [0], [0], [1], [0, 0, 1, 1], [], []>} : vector<16x256xbf16>, vector<256x512xbf16>, vector<16x512xf32> -> vector<16x512xf32>
    %c0_15 = arith.constant 0 : index
    %c0_16 = arith.constant 0 : index
    %20 = vector.load %arg7[%c0_15, %c0_16] : memref<1x512xf32, #tpu.memory_space<vmem>>, vector<1x512xf32>
    %21 = vector.broadcast %20 : vector<1x512xf32> to vector<16x512xf32>
    %22 = arith.addf %19, %21 : vector<16x512xf32>
    %cst_17 = arith.constant 0.000000e+00 : f32
    %23 = vector.broadcast %cst_17 : f32 to vector<16x512xf32>
    %24 = arith.maximumf %22, %23 : vector<16x512xf32>
    %25 = arith.truncf %24 : vector<16x512xf32> to vector<16x512xbf16>
    %c0_18 = arith.constant 0 : index
    %c0_19 = arith.constant 0 : index
    %26 = vector.load %arg8[%c0_18, %c0_19] : memref<512x128xbf16, #tpu.memory_space<vmem>>, vector<512x128xbf16>
    %cst_20 = arith.constant dense<0.000000e+00> : vector<16x128xf32>
    %27 = tpu.matmul %25, %26, %cst_20 {dimension_numbers = #tpu.dot_dimension_numbers<[1], [0], [0], [1], [0, 0, 1, 1], [], []>} : vector<16x512xbf16>, vector<512x128xbf16>, vector<16x128xf32> -> vector<16x128xf32>
    %c0_21 = arith.constant 0 : index
    %c0_22 = arith.constant 0 : index
    %28 = vector.load %arg9[%c0_21, %c0_22] : memref<1x128xf32, #tpu.memory_space<vmem>>, vector<1x128xf32>
    %29 = vector.broadcast %28 : vector<1x128xf32> to vector<16x128xf32>
    %30 = arith.addf %27, %29 : vector<16x128xf32>
    %31 = tpu.iota {dimensions = array<i32: 1>} : vector<16x128xi32>
    %c4_i32 = arith.constant 4 : i32
    %32 = vector.broadcast %c4_i32 : i32 to vector<16x128xi32>
    %33 = arith.cmpi sge, %31, %32 : vector<16x128xi32>
    %c8_i32 = arith.constant 8 : i32
    %34 = vector.broadcast %c8_i32 : i32 to vector<16x128xi32>
    %35 = arith.cmpi slt, %31, %34 : vector<16x128xi32>
    %36 = arith.andi %33, %35 : vector<16x128xi1>
    %cst_23 = arith.constant 0.000000e+00 : f32
    %37 = vector.broadcast %cst_23 : f32 to vector<16x128xf32>
    %38 = arith.maximumf %30, %37 : vector<16x128xf32>
    %39 = math.absf %30 : vector<16x128xf32>
    %cst_24 = arith.constant 0.000000e+00 : f32
    %40 = vector.broadcast %cst_24 : f32 to vector<16x128xf32>
    %41 = arith.subf %40, %39 : vector<16x128xf32>
    %42 = math.exp %41 : vector<16x128xf32>
    %cst_25 = arith.constant 1.000000e+00 : f32
    %43 = vector.broadcast %cst_25 : f32 to vector<16x128xf32>
    %44 = arith.addf %43, %42 : vector<16x128xf32>
    %45 = math.log %44 : vector<16x128xf32>
    %46 = arith.addf %38, %45 : vector<16x128xf32>
    %47 = arith.select %36, %46, %30 : vector<16x128xi1>, vector<16x128xf32>
    %c0_26 = arith.constant 0 : index
    %c0_27 = arith.constant 0 : index
    %48 = vector.load %arg10[%c0_26, %c0_27] : memref<16x128xf32, #tpu.memory_space<vmem>>, vector<16x128xf32>
    tpu.vector_store %arg10[%c0_26, %c0_27], %47 {strides = array<i32>} : memref<16x128xf32, #tpu.memory_space<vmem>>, vector<16x128xf32>,
    return
  }
  func.func @transform_0(%arg0: i32) -> (i32, i32) {
    %c0_i32 = arith.constant 0 : i32
    %c0_i32_0 = arith.constant 0 : i32
    return %arg0, %c0_i32 : i32, i32
  }
  func.func @transform_1(%arg0: i32) -> (i32, i32) {
    %c0_i32 = arith.constant 0 : i32
    %c0_i32_0 = arith.constant 0 : i32
    %c0_i32_1 = arith.constant 0 : i32
    return %c0_i32, %c0_i32_0 : i32, i32
  }
  func.func @transform_2(%arg0: i32) -> (i32, i32) {
    %c0_i32 = arith.constant 0 : i32
    %c0_i32_0 = arith.constant 0 : i32
    %c0_i32_1 = arith.constant 0 : i32
    return %c0_i32, %c0_i32_0 : i32, i32
  }
  func.func @transform_3(%arg0: i32) -> (i32, i32) {
    %c0_i32 = arith.constant 0 : i32
    %c0_i32_0 = arith.constant 0 : i32
    %c0_i32_1 = arith.constant 0 : i32
    return %c0_i32, %c0_i32_0 : i32, i32
  }
  func.func @transform_4(%arg0: i32) -> (i32, i32) {
    %c0_i32 = arith.constant 0 : i32
    %c0_i32_0 = arith.constant 0 : i32
    %c0_i32_1 = arith.constant 0 : i32
    return %c0_i32, %c0_i32_0 : i32, i32
  }
  func.func @transform_5(%arg0: i32) -> (i32, i32) {
    %c0_i32 = arith.constant 0 : i32
    %c0_i32_0 = arith.constant 0 : i32
    %c0_i32_1 = arith.constant 0 : i32
    return %c0_i32, %c0_i32_0 : i32, i32
  }
  func.func @transform_6(%arg0: i32) -> (i32, i32) {
    %c0_i32 = arith.constant 0 : i32
    %c0_i32_0 = arith.constant 0 : i32
    %c0_i32_1 = arith.constant 0 : i32
    return %c0_i32, %c0_i32_0 : i32, i32
  }
  func.func @transform_7(%arg0: i32) -> (i32, i32) {
    %c0_i32 = arith.constant 0 : i32
    %c0_i32_0 = arith.constant 0 : i32
    %c0_i32_1 = arith.constant 0 : i32
    return %c0_i32, %c0_i32_0 : i32, i32
  }
  func.func @transform_8(%arg0: i32) -> (i32, i32) {
    %c0_i32 = arith.constant 0 : i32
    %c0_i32_0 = arith.constant 0 : i32
    %c0_i32_1 = arith.constant 0 : i32
    return %c0_i32, %c0_i32_0 : i32, i32
  }
  func.func @transform_9(%arg0: i32) -> (i32, i32) {
    %c0_i32 = arith.constant 0 : i32
    %c0_i32_0 = arith.constant 0 : i32
    return %arg0, %c0_i32 : i32, i32
  }
}

</mosaic_0001>

<llo_original>
// kernel: _ff_shared_forward_2d.1
$region0: #{_ff_shared_forward_2d.1}
  #allocation0 [shape = 'u32[]', space=smem, size = 0x4, offset = 0x4, fixed_abs, tag = 'smem constant byte address 0x4 - core index']
  #allocation1 [shape = 'u32[144,128]{1,0:T(1,128)}', space=vmem, size = 0x12000, scoped, tag = 'internal scratch']
  %s0 = inlined_call_operand.hbm [shape: f32[16,16], index: 0, kind: input, shape index: {}]
  %s1 = inlined_call_operand.hbm [shape: bf16[16,512], index: 1, kind: input, shape index: {}]
  %s2 = inlined_call_operand.vmem [shape: f32[1,512], index: 2, kind: input, shape index: {}]
  %s3 = inlined_call_operand.hbm [shape: bf16[512,256], index: 3, kind: input, shape index: {}]
  %s4 = inlined_call_operand.vmem [shape: f32[1,256], index: 4, kind: input, shape index: {}]
  %s5 = inlined_call_operand.hbm [shape: bf16[256,512], index: 5, kind: input, shape index: {}]
  %s6 = inlined_call_operand.vmem [shape: f32[1,512], index: 6, kind: input, shape index: {}]
  %s7 = inlined_call_operand.hbm [shape: bf16[512,128], index: 7, kind: input, shape index: {}]
  %s8 = inlined_call_operand.vmem [shape: f32[1,128], index: 8, kind: input, shape index: {}]
  %s9 = inlined_call_operand.vmem [shape: f32[16,128], index: 9, kind: output, shape index: {}]
  %s10 = sld [smem:[#allocation0]]
  $region66: #{_ff_shared_forward_2d.1} parent=0
    _
  %s12 = ssub.s32 1, %s10
  %s13 = scalar_select 0, %s12, %s10
  $region1: #{_ff_shared_forward_2d.1} parent=0
    #allocation2 [shape = 'u8[8192]{0}', space=vmem, size = 0x2000, scoped, tag = 'input window, operand 0, single buffered']
    #allocation3 [shape = 's32[1]{0}', space=sflag, size = 0x4, scoped, tag = 'scoped memory for _ff_shared_forward_2d.1']
    #allocation4 [shape = 'u8[16384]{0}', space=vmem, size = 0x4000, scoped, tag = 'input window, operand 1, single buffered']
    #allocation5 [shape = 's32[1]{0}', space=sflag, size = 0x4, scoped, tag = 'scoped memory for _ff_shared_forward_2d.1']
    #allocation6 [shape = 'u8[262144]{0}', space=vmem, size = 0x40000, scoped, tag = 'input window, operand 3, single buffered']
    #allocation7 [shape = 'u8[262144]{0}', space=vmem, size = 0x40000, scoped, tag = 'input window, operand 5, single buffered']
    #allocation8 [shape = 's32[1]{0}', space=sflag, size = 0x4, scoped, tag = 'scoped memory for _ff_shared_forward_2d.1']
    #allocation9 [shape = 'u8[131072]{0}', space=vmem, size = 0x20000, scoped, tag = 'input window, operand 7, single buffered']
    %14 = vsyncpa [#allocation3], 0
    %15 = vsyncpa [#allocation5], 0
    %16 = vsyncpa [#allocation8], 0
    // Predicated region
    $region2: #{_ff_shared_forward_2d.1} parent=1 // pred_check
      _
    $region3: #{_ff_shared_forward_2d.1} parent=1 // pred_check_branch
      %18 = sbr.rel (0) target = $region5
    $region4: #{_ff_shared_forward_2d.1} parent=1 // pred_region
      %s20 = ssub.s32 256, 256
      %21 = vsyncadd [#allocation3], %s20
      %s22 = sshll.u32 [#allocation2], 4
      %s23 = int_to_ptr.vmem [resolvable:$true] %s22
      %28 = dma.hbm_to_vmem [thread:$0]  %s0, 256, %s23, [#allocation3], 128, 128, 8
    $region5: #{_ff_shared_forward_2d.1} parent=1 // pred_fallthru
      _
    // Predicated region
    $region6: #{_ff_shared_forward_2d.1} parent=1 // pred_check
      _
    $region7: #{_ff_shared_forward_2d.1} parent=1 // pred_check_branch
      %30 = sbr.rel (0) target = $region9
    $region8: #{_ff_shared_forward_2d.1} parent=1 // pred_region
      %s32 = ssub.s32 512, 512
      %33 = vsyncadd [#allocation5], %s32
      %s34 = sshll.u32 [#allocation4], 4
      %s35 = int_to_ptr.vmem [resolvable:$true] %s34
      %40 = dma.hbm_to_vmem [thread:$0]  %s1, 512, %s35, [#allocation5], 256, 256, 16
    $region9: #{_ff_shared_forward_2d.1} parent=1 // pred_fallthru
      _
    // Predicated region
    $region10: #{_ff_shared_forward_2d.1} parent=1 // pred_check
      _
    $region11: #{_ff_shared_forward_2d.1} parent=1 // pred_check_branch
      %42 = sbr.rel (0) target = $region13
    $region12: #{_ff_shared_forward_2d.1} parent=1 // pred_region
      _
    $region13: #{_ff_shared_forward_2d.1} parent=1 // pred_fallthru
      _
    // Predicated region
    $region14: #{_ff_shared_forward_2d.1} parent=1 // pred_check
      _
    $region15: #{_ff_shared_forward_2d.1} parent=1 // pred_check_branch
      %44 = sbr.rel (0) target = $region17
    $region16: #{_ff_shared_forward_2d.1} parent=1 // pred_region
      %s46 = ssub.s32 8192, 8192
      %47 = vsyncadd [#allocation5], %s46
      %s48 = sshll.u32 [#allocation6], 4
      %s49 = int_to_ptr.vmem [resolvable:$true] %s48
      %54 = dma.hbm_to_vmem [thread:$0]  %s3, 8192, %s49, [#allocation5], 128, 128, 8
    $region17: #{_ff_shared_forward_2d.1} parent=1 // pred_fallthru
      _
    // Predicated region
    $region18: #{_ff_shared_forward_2d.1} parent=1 // pred_check
      _
    $region19: #{_ff_shared_forward_2d.1} parent=1 // pred_check_branch
      %56 = sbr.rel (0) target = $region21
    $region20: #{_ff_shared_forward_2d.1} parent=1 // pred_region
      _
    $region21: #{_ff_shared_forward_2d.1} parent=1 // pred_fallthru
      _
    // Predicated region
    $region22: #{_ff_shared_forward_2d.1} parent=1 // pred_check
      _
    $region23: #{_ff_shared_forward_2d.1} parent=1 // pred_check_branch
      %58 = sbr.rel (0) target = $region25
    $region24: #{_ff_shared_forward_2d.1} parent=1 // pred_region
      %s60 = ssub.s32 8192, 8192
      %61 = vsyncadd [#allocation8], %s60
      %s62 = sshll.u32 [#allocation7], 4
      %s63 = int_to_ptr.vmem [resolvable:$true] %s62
      %68 = dma.hbm_to_vmem [thread:$0]  %s5, 8192, %s63, [#allocation8], 256, 256, 16
    $region25: #{_ff_shared_forward_2d.1} parent=1 // pred_fallthru
      _
    // Predicated region
    $region26: #{_ff_shared_forward_2d.1} parent=1 // pred_check
      _
    $region27: #{_ff_shared_forward_2d.1} parent=1 // pred_check_branch
      %70 = sbr.rel (0) target = $region29
    $region28: #{_ff_shared_forward_2d.1} parent=1 // pred_region
      _
    $region29: #{_ff_shared_forward_2d.1} parent=1 // pred_fallthru
      _
    // Predicated region
    $region30: #{_ff_shared_forward_2d.1} parent=1 // pred_check
      _
    $region31: #{_ff_shared_forward_2d.1} parent=1 // pred_check_branch
      %72 = sbr.rel (0) target = $region33
    $region32: #{_ff_shared_forward_2d.1} parent=1 // pred_region
      %s74 = ssub.s32 4096, 4096
      %75 = vsyncadd [#allocation8], %s74
      %s76 = sshll.u32 [#allocation9], 4
      %s77 = int_to_ptr.vmem [resolvable:$true] %s76
      %82 = dma.hbm_to_vmem [thread:$0]  %s7, 4096, %s77, [#allocation8], 64, 64, 4
    $region33: #{_ff_shared_forward_2d.1} parent=1 // pred_fallthru
      _
    // Predicated region
    $region34: #{_ff_shared_forward_2d.1} parent=1 // pred_check
      _
    $region35: #{_ff_shared_forward_2d.1} parent=1 // pred_check_branch
      %84 = sbr.rel (0) target = $region37
    $region36: #{_ff_shared_forward_2d.1} parent=1 // pred_region
      _
    $region37: #{_ff_shared_forward_2d.1} parent=1 // pred_fallthru
      _
    // Predicated region
    $region38: #{_ff_shared_forward_2d.1} parent=1 // pred_check
      _
    $region39: #{_ff_shared_forward_2d.1} parent=1 // pred_check_branch
      %86 = sbr.rel (0) target = $region41
    $region40: #{_ff_shared_forward_2d.1} parent=1 // pred_region
      %87 = dma.done [#allocation3], 256
    $region41: #{_ff_shared_forward_2d.1} parent=1 // pred_fallthru
      _
    // Predicated region
    $region42: #{_ff_shared_forward_2d.1} parent=1 // pred_check
      _
    $region43: #{_ff_shared_forward_2d.1} parent=1 // pred_check_branch
      %89 = sbr.rel (0) target = $region45
    $region44: #{_ff_shared_forward_2d.1} parent=1 // pred_region
      %90 = dma.done [#allocation5], 512
    $region45: #{_ff_shared_forward_2d.1} parent=1 // pred_fallthru
      _
    // Predicated region
    $region46: #{_ff_shared_forward_2d.1} parent=1 // pred_check
      _
    $region47: #{_ff_shared_forward_2d.1} parent=1 // pred_check_branch
      %92 = sbr.rel (0) target = $region49
    $region48: #{_ff_shared_forward_2d.1} parent=1 // pred_region
      %93 = dma.done [#allocation5], 8192
    $region49: #{_ff_shared_forward_2d.1} parent=1 // pred_fallthru
      _
    // Predicated region
    $region50: #{_ff_shared_forward_2d.1} parent=1 // pred_check
      _
    $region51: #{_ff_shared_forward_2d.1} parent=1 // pred_check_branch
      %95 = sbr.rel (0) target = $region53
    $region52: #{_ff_shared_forward_2d.1} parent=1 // pred_region
      %96 = dma.done [#allocation8], 8192
    $region53: #{_ff_shared_forward_2d.1} parent=1 // pred_fallthru
      _
    // Predicated region
    $region54: #{_ff_shared_forward_2d.1} parent=1 // pred_check
      _
    $region55: #{_ff_shared_forward_2d.1} parent=1 // pred_check_branch
      %98 = sbr.rel (0) target = $region57
    $region56: #{_ff_shared_forward_2d.1} parent=1 // pred_region
      %99 = dma.done [#allocation8], 4096
    $region57: #{_ff_shared_forward_2d.1} parent=1 // pred_fallthru
      _
    %v101 = vld [vmem:[#allocation2] sm:$0xff]
    %v102 = vld [vmem:[#allocation2 + $0x8] sm:$0xff]
    %v103 = vpack.c.bf16 %v102, %v101
    %v104 = vld [vmem:[#allocation4] sm:$0xff]
    %v105 = vld [vmem:[#allocation4 + $0x8] sm:$0xff]
    %v106 = vld [vmem:[#allocation4 + $0x10] sm:$0xff]
    %v107 = vld [vmem:[#allocation4 + $0x18] sm:$0xff]
    %v108 = vld [vmem:[%s2] sm:$0xf]
    %v110 = vlaneseq
    %v111 = vshrl.u32 %v110, 7
    %v112 = vsub.s32 0, %v111
    %v113 = vrot.slane %v108, %v112
    %v114 = vlaneseq
    %v115 = vshrl.u32 %v114, 7
    %v116 = vsub.s32 1, %v115
    %v117 = vrot.slane %v108, %v116
    %v118 = vlaneseq
    %v119 = vshrl.u32 %v118, 7
    %v120 = vsub.s32 2, %v119
    %v121 = vrot.slane %v108, %v120
    %v122 = vlaneseq
    %v123 = vshrl.u32 %v122, 7
    %v124 = vsub.s32 3, %v123
    %v125 = vrot.slane %v108, %v124
    %v134 = vunpack.c.l.b16 %v104
    %v135 = vunpack.c.h.b16 %v104
    %v136 = vunpack.c.l.b16 %v105
    %v137 = vunpack.c.h.b16 %v105
    %v138 = vunpack.c.l.b16 %v106
    %v139 = vunpack.c.h.b16 %v106
    %v140 = vunpack.c.l.b16 %v107
    %v141 = vunpack.c.h.b16 %v107
    %v142 = vpack.c.b16 %v138, %v134
    %v143 = vpack.c.b16 %v139, %v135
    %v144 = vpack.c.b16 %v140, %v136
    %v145 = vpack.c.b16 %v141, %v137
    %vm150 = vcmask 130048
    %v152 = vsel %vm150, %v103, 0
    %154 = vmatprep.subr.bf16.mxu0 %v143
    %155 = vmatpush1.bf16.msra.mxu0 %v142
    %156 = vmatprep.subr.bf16.mxu0 0
    %157 = vmatpush1.bf16.msra.mxu0 0
    %158 = vmatprep.subr.bf16.mxu0 0
    %159 = vmatpush1.bf16.msra.mxu0 0
    %160 = vmatprep.subr.bf16.mxu0 0
    %161 = vmatpush1.bf16.msra.mxu0 0
    %162 = vmatprep.subr.bf16.mxu0 0
    %163 = vmatpush1.bf16.msra.mxu0 0
    %164 = vmatprep.subr.bf16.mxu0 0
    %165 = vmatpush1.bf16.msra.mxu0 0
    %166 = vmatprep.subr.bf16.mxu0 0
    %167 = vmatpush1.bf16.msra.mxu0 0
    %168 = vmatprep.subr.bf16.mxu0 0
    %169 = vmatpush1.bf16.msra.mxu0 0
    %170 = vmatprep.subr.bf16.mxu0 0
    %171 = vmatpush1.bf16.msra.mxu0 0
    %172 = vmatprep.subr.bf16.mxu0 0
    %173 = vmatpush1.bf16.msra.mxu0 0
    %174 = vmatprep.subr.bf16.mxu0 0
    %175 = vmatpush1.bf16.msra.mxu0 0
    %176 = vmatprep.subr.bf16.mxu0 0
    %177 = vmatpush1.bf16.msra.mxu0 0
    %178 = vmatprep.subr.bf16.mxu0 0
    %179 = vmatpush1.bf16.msra.mxu0 0
    %180 = vmatprep.subr.bf16.mxu0 0
    %181 = vmatpush1.bf16.msra.mxu0 0
    %182 = vmatprep.subr.bf16.mxu0 0
    %183 = vmatpush1.bf16.msra.mxu0 0
    %184 = vmatprep.subr.bf16.mxu0 0
    %185 = vmatpush1.bf16.msra.mxu0 0
    %186 = vmatprep.mubr.bf16.mxu0 0
    %187 = vmatmul.mubr.bf16.gmra.mrb[0].mxu0 %v152
    %v188 = vpop.f32.mrb[0].mxu0
    %v189 = vadd.f32 %v113, %v188
    %v190 = vpop.f32.mrb[0].mxu0
    %v191 = vadd.f32 %v117, %v190
    %v192 = vpop.f32.mrb[0].mxu0
    %v193 = vadd.f32 %v113, %v192
    %v194 = vpop.f32.mrb[0].mxu0
    %v195 = vadd.f32 %v117, %v194
    %196 = vdwg.mxu0
    %197 = vmatprep.subr.bf16.mxu0 %v145
    %198 = vmatpush1.bf16.msra.mxu0 %v144
    %199 = vmatprep.subr.bf16.mxu0 0
    %200 = vmatpush1.bf16.msra.mxu0 0
    %201 = vmatprep.subr.bf16.mxu0 0
    %202 = vmatpush1.bf16.msra.mxu0 0
    %203 = vmatprep.subr.bf16.mxu0 0
    %204 = vmatpush1.bf16.msra.mxu0 0
    %205 = vmatprep.subr.bf16.mxu0 0
    %206 = vmatpush1.bf16.msra.mxu0 0
    %207 = vmatprep.subr.bf16.mxu0 0
    %208 = vmatpush1.bf16.msra.mxu0 0
    %209 = vmatprep.subr.bf16.mxu0 0
    %210 = vmatpush1.bf16.msra.mxu0 0
    %211 = vmatprep.subr.bf16.mxu0 0
    %212 = vmatpush1.bf16.msra.mxu0 0
    %213 = vmatprep.subr.bf16.mxu0 0
    %214 = vmatpush1.bf16.msra.mxu0 0
    %215 = vmatprep.subr.bf16.mxu0 0
    %216 = vmatpush1.bf16.msra.mxu0 0
    %217 = vmatprep.subr.bf16.mxu0 0
    %218 = vmatpush1.bf16.msra.mxu0 0
    %219 = vmatprep.subr.bf16.mxu0 0
    %220 = vmatpush1.bf16.msra.mxu0 0
    %221 = vmatprep.subr.bf16.mxu0 0
    %222 = vmatpush1.bf16.msra.mxu0 0
    %223 = vmatprep.subr.bf16.mxu0 0
    %224 = vmatpush1.bf16.msra.mxu0 0
    %225 = vmatprep.subr.bf16.mxu0 0
    %226 = vmatpush1.bf16.msra.mxu0 0
    %227 = vmatprep.subr.bf16.mxu0 0
    %228 = vmatpush1.bf16.msra.mxu0 0
    %229 = vmatprep.mubr.bf16.mxu0 0
    %230 = vmatmul.mubr.bf16.gmra.mrb[0].mxu0 %v152
    %v231 = vpop.f32.mrb[0].mxu0
    %v232 = vadd.f32 %v121, %v231
    %v233 = vpop.f32.mrb[0].mxu0
    %v234 = vadd.f32 %v125, %v233
    %v235 = vpop.f32.mrb[0].mxu0
    %v236 = vadd.f32 %v121, %v235
    %v237 = vpop.f32.mrb[0].mxu0
    %v238 = vadd.f32 %v125, %v237
    %239 = vdwg.mxu0
    %v240 = vmax.f32 %v189, 0.0
    %v241 = vmax.f32 %v191, 0.0
    %v242 = vmax.f32 %v232, 0.0
    %v243 = vmax.f32 %v234, 0.0
    %v244 = vmax.f32 %v193, 0.0
    %v245 = vmax.f32 %v195, 0.0
    %v246 = vmax.f32 %v236, 0.0
    %v247 = vmax.f32 %v238, 0.0
    %v248 = vpack.c.bf16 %v244, %v240
    %v249 = vpack.c.bf16 %v245, %v241
    %v250 = vpack.c.bf16 %v246, %v242
    %v251 = vpack.c.bf16 %v247, %v243
    %v252 = vld [vmem:[#allocation6] sm:$0xff]
    %v253 = vld [vmem:[#allocation6 + $0x8] sm:$0xff]
    %v254 = vld [vmem:[#allocation6 + $0x10] sm:$0xff]
    %v255 = vld [vmem:[#allocation6 + $0x18] sm:$0xff]
    %v256 = vld [vmem:[#allocation6 + $0x20] sm:$0xff]
    %v257 = vld [vmem:[#allocation6 + $0x28] sm:$0xff]
    %v258 = vld [vmem:[#allocation6 + $0x30] sm:$0xff]
    %v259 = vld [vmem:[#allocation6 + $0x38] sm:$0xff]
    %v260 = vld [vmem:[#allocation6 + $0x40] sm:$0xff]
    %v261 = vld [vmem:[#allocation6 + $0x48] sm:$0xff]
    %v262 = vld [vmem:[#allocation6 + $0x50] sm:$0xff]
    %v263 = vld [vmem:[#allocation6 + $0x58] sm:$0xff]
    %v264 = vld [vmem:[#allocation6 + $0x60] sm:$0xff]
    %v265 = vld [vmem:[#allocation6 + $0x68] sm:$0xff]
    %v266 = vld [vmem:[#allocation6 + $0x70] sm:$0xff]
    %v267 = vld [vmem:[#allocation6 + $0x78] sm:$0xff]
    %v268 = vld [vmem:[#allocation6 + $0x80] sm:$0xff]
    %v269 = vld [vmem:[#allocation6 + $0x88] sm:$0xff]
    %v270 = vld [vmem:[#allocation6 + $0x90] sm:$0xff]
    %v271 = vld [vmem:[#allocation6 + $0x98] sm:$0xff]
    %v272 = vld [vmem:[#allocation6 + $0xa0] sm:$0xff]
    %v273 = vld [vmem:[#allocation6 + $0xa8] sm:$0xff]
    %v274 = vld [vmem:[#allocation6 + $0xb0] sm:$0xff]
    %v275 = vld [vmem:[#allocation6 + $0xb8] sm:$0xff]
    %v276 = vld [vmem:[#allocation6 + $0xc0] sm:$0xff]
    %v277 = vld [vmem:[#allocation6 + $0xc8] sm:$0xff]
    %v278 = vld [vmem:[#allocation6 + $0xd0] sm:$0xff]
    %v279 = vld [vmem:[#allocation6 + $0xd8] sm:$0xff]
    %v280 = vld [vmem:[#allocation6 + $0xe0] sm:$0xff]
    %v281 = vld [vmem:[#allocation6 + $0xe8] sm:$0xff]
    %v282 = vld [vmem:[#allocation6 + $0xf0] sm:$0xff]
    %v283 = vld [vmem:[#allocation6 + $0xf8] sm:$0xff]
    %v284 = vld [vmem:[#allocation6 + $0x100] sm:$0xff]
    %v285 = vld [vmem:[#allocation6 + $0x108] sm:$0xff]
    %v286 = vld [vmem:[#allocation6 + $0x110] sm:$0xff]
    %v287 = vld [vmem:[#allocation6 + $0x118] sm:$0xff]
    %v288 = vld [vmem:[#allocation6 + $0x120] sm:$0xff]
    %v289 = vld [vmem:[#allocation6 + $0x128] sm:$0xff]
    %v290 = vld [vmem:[#allocation6 + $0x130] sm:$0xff]
    %v291 = vld [vmem:[#allocation6 + $0x138] sm:$0xff]
    %v292 = vld [vmem:[#allocation6 + $0x140] sm:$0xff]
    %v293 = vld [vmem:[#allocation6 + $0x148] sm:$0xff]
    %v294 = vld [vmem:[#allocation6 + $0x150] sm:$0xff]
    %v295 = vld [vmem:[#allocation6 + $0x158] sm:$0xff]
    %v296 = vld [vmem:[#allocation6 + $0x160] sm:$0xff]
    %v297 = vld [vmem:[#allocation6 + $0x168] sm:$0xff]
    %v298 = vld [vmem:[#allocation6 + $0x170] sm:$0xff]
    %v299 = vld [vmem:[#allocation6 + $0x178] sm:$0xff]
    %v300 = vld [vmem:[#allocation6 + $0x180] sm:$0xff]
    %v301 = vld [vmem:[#allocation6 + $0x188] sm:$0xff]
    %v302 = vld [vmem:[#allocation6 + $0x190] sm:$0xff]
    %v303 = vld [vmem:[#allocation6 + $0x198] sm:$0xff]
    %v304 = vld [vmem:[#allocation6 + $0x1a0] sm:$0xff]
    %v305 = vld [vmem:[#allocation6 + $0x1a8] sm:$0xff]
    %v306 = vld [vmem:[#allocation6 + $0x1b0] sm:$0xff]
    %v307 = vld [vmem:[#allocation6 + $0x1b8] sm:$0xff]
    %v308 = vld [vmem:[#allocation6 + $0x1c0] sm:$0xff]
    %v309 = vld [vmem:[#allocation6 + $0x1c8] sm:$0xff]
    %v310 = vld [vmem:[#allocation6 + $0x1d0] sm:$0xff]
    %v311 = vld [vmem:[#allocation6 + $0x1d8] sm:$0xff]
    %v312 = vld [vmem:[#allocation6 + $0x1e0] sm:$0xff]
    %v313 = vld [vmem:[#allocation6 + $0x1e8] sm:$0xff]
    %v314 = vld [vmem:[#allocation6 + $0x1f0] sm:$0xff]
    %v315 = vld [vmem:[#allocation6 + $0x1f8] sm:$0xff]
    %v316 = vld [vmem:[%s4] sm:$0x3]
    %v318 = vlaneseq
    %v319 = vshrl.u32 %v318, 7
    %v320 = vsub.s32 0, %v319
    %v321 = vrot.slane %v316, %v320
    %v322 = vlaneseq
    %v323 = vshrl.u32 %v322, 7
    %v324 = vsub.s32 1, %v323
    %v325 = vrot.slane %v316, %v324
    %v392 = vunpack.c.l.b16 %v252
    %v393 = vunpack.c.h.b16 %v252
    %v394 = vunpack.c.l.b16 %v253
    %v395 = vunpack.c.h.b16 %v253
    %v396 = vunpack.c.l.b16 %v254
    %v397 = vunpack.c.h.b16 %v254
    %v398 = vunpack.c.l.b16 %v255
    %v399 = vunpack.c.h.b16 %v255
    %v400 = vunpack.c.l.b16 %v256
    %v401 = vunpack.c.h.b16 %v256
    %v402 = vunpack.c.l.b16 %v257
    %v403 = vunpack.c.h.b16 %v257
    %v404 = vunpack.c.l.b16 %v258
    %v405 = vunpack.c.h.b16 %v258
    %v406 = vunpack.c.l.b16 %v259
    %v407 = vunpack.c.h.b16 %v259
    %v408 = vunpack.c.l.b16 %v260
    %v409 = vunpack.c.h.b16 %v260
    %v410 = vunpack.c.l.b16 %v261
    %v411 = vunpack.c.h.b16 %v261
    %v412 = vunpack.c.l.b16 %v262
    %v413 = vunpack.c.h.b16 %v262
    %v414 = vunpack.c.l.b16 %v263
    %v415 = vunpack.c.h.b16 %v263
    %v416 = vunpack.c.l.b16 %v264
    %v417 = vunpack.c.h.b16 %v264
    %v418 = vunpack.c.l.b16 %v265
    %v419 = vunpack.c.h.b16 %v265
    %v420 = vunpack.c.l.b16 %v266
    %v421 = vunpack.c.h.b16 %v266
    %v422 = vunpack.c.l.b16 %v267
    %v423 = vunpack.c.h.b16 %v267
    %v424 = vunpack.c.l.b16 %v268
    %v425 = vunpack.c.h.b16 %v268
    %v426 = vunpack.c.l.b16 %v269
    %v427 = vunpack.c.h.b16 %v269
    %v428 = vunpack.c.l.b16 %v270
    %v429 = vunpack.c.h.b16 %v270
    %v430 = vunpack.c.l.b16 %v271
    %v431 = vunpack.c.h.b16 %v271
    %v432 = vunpack.c.l.b16 %v272
    %v433 = vunpack.c.h.b16 %v272
    %v434 = vunpack.c.l.b16 %v273
    %v435 = vunpack.c.h.b16 %v273
    %v436 = vunpack.c.l.b16 %v274
    %v437 = vunpack.c.h.b16 %v274
    %v438 = vunpack.c.l.b16 %v275
    %v439 = vunpack.c.h.b16 %v275
    %v440 = vunpack.c.l.b16 %v276
    %v441 = vunpack.c.h.b16 %v276
    %v442 = vunpack.c.l.b16 %v277
    %v443 = vunpack.c.h.b16 %v277
    %v444 = vunpack.c.l.b16 %v278
    %v445 = vunpack.c.h.b16 %v278
    %v446 = vunpack.c.l.b16 %v279
    %v447 = vunpack.c.h.b16 %v279
    %v448 = vunpack.c.l.b16 %v280
    %v449 = vunpack.c.h.b16 %v280
    %v450 = vunpack.c.l.b16 %v281
    %v451 = vunpack.c.h.b16 %v281
    %v452 = vunpack.c.l.b16 %v282
    %v453 = vunpack.c.h.b16 %v282
    %v454 = vunpack.c.l.b16 %v283
    %v455 = vunpack.c.h.b16 %v283
    %v456 = vunpack.c.l.b16 %v284
    %v457 = vunpack.c.h.b16 %v284
    %v458 = vunpack.c.l.b16 %v285
    %v459 = vunpack.c.h.b16 %v285
    %v460 = vunpack.c.l.b16 %v286
    %v461 = vunpack.c.h.b16 %v286
    %v462 = vunpack.c.l.b16 %v287
    %v463 = vunpack.c.h.b16 %v287
    %v464 = vunpack.c.l.b16 %v288
    %v465 = vunpack.c.h.b16 %v288
    %v466 = vunpack.c.l.b16 %v289
    %v467 = vunpack.c.h.b16 %v289
    %v468 = vunpack.c.l.b16 %v290
    %v469 = vunpack.c.h.b16 %v290
    %v470 = vunpack.c.l.b16 %v291
    %v471 = vunpack.c.h.b16 %v291
    %v472 = vunpack.c.l.b16 %v292
    %v473 = vunpack.c.h.b16 %v292
    %v474 = vunpack.c.l.b16 %v293
    %v475 = vunpack.c.h.b16 %v293
    %v476 = vunpack.c.l.b16 %v294
    %v477 = vunpack.c.h.b16 %v294
    %v478 = vunpack.c.l.b16 %v295
    %v479 = vunpack.c.h.b16 %v295
    %v480 = vunpack.c.l.b16 %v296
    %v481 = vunpack.c.h.b16 %v296
    %v482 = vunpack.c.l.b16 %v297
    %v483 = vunpack.c.h.b16 %v297
    %v484 = vunpack.c.l.b16 %v298
    %v485 = vunpack.c.h.b16 %v298
    %v486 = vunpack.c.l.b16 %v299
    %v487 = vunpack.c.h.b16 %v299
    %v488 = vunpack.c.l.b16 %v300
    %v489 = vunpack.c.h.b16 %v300
    %v490 = vunpack.c.l.b16 %v301
    %v491 = vunpack.c.h.b16 %v301
    %v492 = vunpack.c.l.b16 %v302
    %v493 = vunpack.c.h.b16 %v302
    %v494 = vunpack.c.l.b16 %v303
    %v495 = vunpack.c.h.b16 %v303
    %v496 = vunpack.c.l.b16 %v304
    %v497 = vunpack.c.h.b16 %v304
    %v498 = vunpack.c.l.b16 %v305
    %v499 = vunpack.c.h.b16 %v305
    %v500 = vunpack.c.l.b16 %v306
    %v501 = vunpack.c.h.b16 %v306
    %v502 = vunpack.c.l.b16 %v307
    %v503 = vunpack.c.h.b16 %v307
    %v504 = vunpack.c.l.b16 %v308
    %v505 = vunpack.c.h.b16 %v308
    %v506 = vunpack.c.l.b16 %v309
    %v507 = vunpack.c.h.b16 %v309
    %v508 = vunpack.c.l.b16 %v310
    %v509 = vunpack.c.h.b16 %v310
    %v510 = vunpack.c.l.b16 %v311
    %v511 = vunpack.c.h.b16 %v311
    %v512 = vunpack.c.l.b16 %v312
    %v513 = vunpack.c.h.b16 %v312
    %v514 = vunpack.c.l.b16 %v313
    %v515 = vunpack.c.h.b16 %v313
    %v516 = vunpack.c.l.b16 %v314
    %v517 = vunpack.c.h.b16 %v314
    %v518 = vunpack.c.l.b16 %v315
    %v519 = vunpack.c.h.b16 %v315
    %v520 = vpack.c.b16 %v394, %v392
    %v521 = vpack.c.b16 %v395, %v393
    %v522 = vpack.c.b16 %v398, %v396
    %v523 = vpack.c.b16 %v399, %v397
    %v524 = vpack.c.b16 %v402, %v400
    %v525 = vpack.c.b16 %v403, %v401
    %v526 = vpack.c.b16 %v406, %v404
    %v527 = vpack.c.b16 %v407, %v405
    %v528 = vpack.c.b16 %v410, %v408
    %v529 = vpack.c.b16 %v411, %v409
    %v530 = vpack.c.b16 %v414, %v412
    %v531 = vpack.c.b16 %v415, %v413
    %v532 = vpack.c.b16 %v418, %v416
    %v533 = vpack.c.b16 %v419, %v417
    %v534 = vpack.c.b16 %v422, %v420
    %v535 = vpack.c.b16 %v423, %v421
    %v536 = vpack.c.b16 %v426, %v424
    %v537 = vpack.c.b16 %v427, %v425
    %v538 = vpack.c.b16 %v430, %v428
    %v539 = vpack.c.b16 %v431, %v429
    %v540 = vpack.c.b16 %v434, %v432
    %v541 = vpack.c.b16 %v435, %v433
    %v542 = vpack.c.b16 %v438, %v436
    %v543 = vpack.c.b16 %v439, %v437
    %v544 = vpack.c.b16 %v442, %v440
    %v545 = vpack.c.b16 %v443, %v441
    %v546 = vpack.c.b16 %v446, %v444
    %v547 = vpack.c.b16 %v447, %v445
    %v548 = vpack.c.b16 %v450, %v448
    %v549 = vpack.c.b16 %v451, %v449
    %v550 = vpack.c.b16 %v454, %v452
    %v551 = vpack.c.b16 %v455, %v453
    %v552 = vpack.c.b16 %v458, %v456
    %v553 = vpack.c.b16 %v459, %v457
    %v554 = vpack.c.b16 %v462, %v460
    %v555 = vpack.c.b16 %v463, %v461
    %v556 = vpack.c.b16 %v466, %v464
    %v557 = vpack.c.b16 %v467, %v465
    %v558 = vpack.c.b16 %v470, %v468
    %v559 = vpack.c.b16 %v471, %v469
    %v560 = vpack.c.b16 %v474, %v472
    %v561 = vpack.c.b16 %v475, %v473
    %v562 = vpack.c.b16 %v478, %v476
    %v563 = vpack.c.b16 %v479, %v477
    %v564 = vpack.c.b16 %v482, %v480
    %v565 = vpack.c.b16 %v483, %v481
    %v566 = vpack.c.b16 %v486, %v484
    %v567 = vpack.c.b16 %v487, %v485
    %v568 = vpack.c.b16 %v490, %v488
    %v569 = vpack.c.b16 %v491, %v489
    %v570 = vpack.c.b16 %v494, %v492
    %v571 = vpack.c.b16 %v495, %v493
    %v572 = vpack.c.b16 %v498, %v496
    %v573 = vpack.c.b16 %v499, %v497
    %v574 = vpack.c.b16 %v502, %v500
    %v575 = vpack.c.b16 %v503, %v501
    %v576 = vpack.c.b16 %v506, %v504
    %v577 = vpack.c.b16 %v507, %v505
    %v578 = vpack.c.b16 %v510, %v508
    %v579 = vpack.c.b16 %v511, %v509
    %v580 = vpack.c.b16 %v514, %v512
    %v581 = vpack.c.b16 %v515, %v513
    %v582 = vpack.c.b16 %v518, %v516
    %v583 = vpack.c.b16 %v519, %v517
    %648 = vmatprep.subr.bf16.mxu0 %v521
    %649 = vmatpush1.bf16.msra.mxu0 %v520
    %650 = vmatprep.subr.bf16.mxu0 %v523
    %651 = vmatpush1.bf16.msra.mxu0 %v522
    %652 = vmatprep.subr.bf16.mxu0 %v525
    %653 = vmatpush1.bf16.msra.mxu0 %v524
    %654 = vmatprep.subr.bf16.mxu0 %v527
    %655 = vmatpush1.bf16.msra.mxu0 %v526
    %656 = vmatprep.subr.bf16.mxu0 %v529
    %657 = vmatpush1.bf16.msra.mxu0 %v528
    %658 = vmatprep.subr.bf16.mxu0 %v531
    %659 = vmatpush1.bf16.msra.mxu0 %v530
    %660 = vmatprep.subr.bf16.mxu0 %v533
    %661 = vmatpush1.bf16.msra.mxu0 %v532
    %662 = vmatprep.subr.bf16.mxu0 %v535
    %663 = vmatpush1.bf16.msra.mxu0 %v534
    %664 = vmatprep.subr.bf16.mxu0 %v537
    %665 = vmatpush1.bf16.msra.mxu0 %v536
    %666 = vmatprep.subr.bf16.mxu0 %v539
    %667 = vmatpush1.bf16.msra.mxu0 %v538
    %668 = vmatprep.subr.bf16.mxu0 %v541
    %669 = vmatpush1.bf16.msra.mxu0 %v540
    %670 = vmatprep.subr.bf16.mxu0 %v543
    %671 = vmatpush1.bf16.msra.mxu0 %v542
    %672 = vmatprep.subr.bf16.mxu0 %v545
    %673 = vmatpush1.bf16.msra.mxu0 %v544
    %674 = vmatprep.subr.bf16.mxu0 %v547
    %675 = vmatpush1.bf16.msra.mxu0 %v546
    %676 = vmatprep.subr.bf16.mxu0 %v549
    %677 = vmatpush1.bf16.msra.mxu0 %v548
    %678 = vmatprep.subr.bf16.mxu0 %v551
    %679 = vmatpush1.bf16.msra.mxu0 %v550
    %680 = vmatprep.mubr.bf16.mxu0 %v249
    %681 = vmatmul.mubr.bf16.gmra.mrb[0].mxu0 %v248
    %v682 = vpop.f32.mrb[0].mxu0
    %v683 = vadd.f32 %v321, %v682
    %v684 = vpop.f32.mrb[0].mxu0
    %v685 = vadd.f32 %v325, %v684
    %v686 = vpop.f32.mrb[0].mxu0
    %v687 = vadd.f32 %v321, %v686
    %v688 = vpop.f32.mrb[0].mxu0
    %v689 = vadd.f32 %v325, %v688
    %690 = vdwg.mxu0
    %691 = vmatprep.subr.bf16.mxu0 %v553
    %692 = vmatpush1.bf16.msra.mxu0 %v552
    %693 = vmatprep.subr.bf16.mxu0 %v555
    %694 = vmatpush1.bf16.msra.mxu0 %v554
    %695 = vmatprep.subr.bf16.mxu0 %v557
    %696 = vmatpush1.bf16.msra.mxu0 %v556
    %697 = vmatprep.subr.bf16.mxu0 %v559
    %698 = vmatpush1.bf16.msra.mxu0 %v558
    %699 = vmatprep.subr.bf16.mxu0 %v561
    %700 = vmatpush1.bf16.msra.mxu0 %v560
    %701 = vmatprep.subr.bf16.mxu0 %v563
    %702 = vmatpush1.bf16.msra.mxu0 %v562
    %703 = vmatprep.subr.bf16.mxu0 %v565
    %704 = vmatpush1.bf16.msra.mxu0 %v564
    %705 = vmatprep.subr.bf16.mxu0 %v567
    %706 = vmatpush1.bf16.msra.mxu0 %v566
    %707 = vmatprep.subr.bf16.mxu0 %v569
    %708 = vmatpush1.bf16.msra.mxu0 %v568
    %709 = vmatprep.subr.bf16.mxu0 %v571
    %710 = vmatpush1.bf16.msra.mxu0 %v570
    %711 = vmatprep.subr.bf16.mxu0 %v573
    %712 = vmatpush1.bf16.msra.mxu0 %v572
    %713 = vmatprep.subr.bf16.mxu0 %v575
    %714 = vmatpush1.bf16.msra.mxu0 %v574
    %715 = vmatprep.subr.bf16.mxu0 %v577
    %716 = vmatpush1.bf16.msra.mxu0 %v576
    %717 = vmatprep.subr.bf16.mxu0 %v579
    %718 = vmatpush1.bf16.msra.mxu0 %v578
    %719 = vmatprep.subr.bf16.mxu0 %v581
    %720 = vmatpush1.bf16.msra.mxu0 %v580
    %721 = vmatprep.subr.bf16.mxu0 %v583
    %722 = vmatpush1.bf16.msra.mxu0 %v582
    %723 = vmatprep.mubr.bf16.mxu0 %v251
    %724 = vmatmul.mubr.bf16.gmra.mrb[0].mxu0 %v250
    %v725 = vpop.f32.mrb[0].mxu0
    %v726 = vadd.f32 %v683, %v725
    %v727 = vpop.f32.mrb[0].mxu0
    %v728 = vadd.f32 %v685, %v727
    %v729 = vpop.f32.mrb[0].mxu0
    %v730 = vadd.f32 %v687, %v729
    %v731 = vpop.f32.mrb[0].mxu0
    %v732 = vadd.f32 %v689, %v731
    %733 = vdwg.mxu0
    %v734 = vmax.f32 %v726, 0.0
    %v735 = vmax.f32 %v728, 0.0
    %v736 = vmax.f32 %v730, 0.0
    %v737 = vmax.f32 %v732, 0.0
    %v738 = vpack.c.bf16 %v736, %v734
    %v739 = vpack.c.bf16 %v737, %v735
    %v740 = vld [vmem:[#allocation7] sm:$0xff]
    %v741 = vld [vmem:[#allocation7 + $0x8] sm:$0xff]
    %v742 = vld [vmem:[#allocation7 + $0x10] sm:$0xff]
    %v743 = vld [vmem:[#allocation7 + $0x18] sm:$0xff]
    %v744 = vld [vmem:[#allocation7 + $0x20] sm:$0xff]
    %v745 = vld [vmem:[#allocation7 + $0x28] sm:$0xff]
    %v746 = vld [vmem:[#allocation7 + $0x30] sm:$0xff]
    %v747 = vld [vmem:[#allocation7 + $0x38] sm:$0xff]
    %v748 = vld [vmem:[#allocation7 + $0x40] sm:$0xff]
    %v749 = vld [vmem:[#allocation7 + $0x48] sm:$0xff]
    %v750 = vld [vmem:[#allocation7 + $0x50] sm:$0xff]
    %v751 = vld [vmem:[#allocation7 + $0x58] sm:$0xff]
    %v752 = vld [vmem:[#allocation7 + $0x60] sm:$0xff]
    %v753 = vld [vmem:[#allocation7 + $0x68] sm:$0xff]
    %v754 = vld [vmem:[#allocation7 + $0x70] sm:$0xff]
    %v755 = vld [vmem:[#allocation7 + $0x78] sm:$0xff]
    %v756 = vld [vmem:[#allocation7 + $0x80] sm:$0xff]
    %v757 = vld [vmem:[#allocation7 + $0x88] sm:$0xff]
    %v758 = vld [vmem:[#allocation7 + $0x90] sm:$0xff]
    %v759 = vld [vmem:[#allocation7 + $0x98] sm:$0xff]
    %v760 = vld [vmem:[#allocation7 + $0xa0] sm:$0xff]
    %v761 = vld [vmem:[#allocation7 + $0xa8] sm:$0xff]
    %v762 = vld [vmem:[#allocation7 + $0xb0] sm:$0xff]
    %v763 = vld [vmem:[#allocation7 + $0xb8] sm:$0xff]
    %v764 = vld [vmem:[#allocation7 + $0xc0] sm:$0xff]
    %v765 = vld [vmem:[#allocation7 + $0xc8] sm:$0xff]
    %v766 = vld [vmem:[#allocation7 + $0xd0] sm:$0xff]
    %v767 = vld [vmem:[#allocation7 + $0xd8] sm:$0xff]
    %v768 = vld [vmem:[#allocation7 + $0xe0] sm:$0xff]
    %v769 = vld [vmem:[#allocation7 + $0xe8] sm:$0xff]
    %v770 = vld [vmem:[#allocation7 + $0xf0] sm:$0xff]
    %v771 = vld [vmem:[#allocation7 + $0xf8] sm:$0xff]
    %v772 = vld [vmem:[#allocation7 + $0x100] sm:$0xff]
    %v773 = vld [vmem:[#allocation7 + $0x108] sm:$0xff]
    %v774 = vld [vmem:[#allocation7 + $0x110] sm:$0xff]
    %v775 = vld [vmem:[#allocation7 + $0x118] sm:$0xff]
    %v776 = vld [vmem:[#allocation7 + $0x120] sm:$0xff]
    %v777 = vld [vmem:[#allocation7 + $0x128] sm:$0xff]
    %v778 = vld [vmem:[#allocation7 + $0x130] sm:$0xff]
    %v779 = vld [vmem:[#allocation7 + $0x138] sm:$0xff]
    %v780 = vld [vmem:[#allocation7 + $0x140] sm:$0xff]
    %v781 = vld [vmem:[#allocation7 + $0x148] sm:$0xff]
    %v782 = vld [vmem:[#allocation7 + $0x150] sm:$0xff]
    %v783 = vld [vmem:[#allocation7 + $0x158] sm:$0xff]
    %v784 = vld [vmem:[#allocation7 + $0x160] sm:$0xff]
    %v785 = vld [vmem:[#allocation7 + $0x168] sm:$0xff]
    %v786 = vld [vmem:[#allocation7 + $0x170] sm:$0xff]
    %v787 = vld [vmem:[#allocation7 + $0x178] sm:$0xff]
    %v788 = vld [vmem:[#allocation7 + $0x180] sm:$0xff]
    %v789 = vld [vmem:[#allocation7 + $0x188] sm:$0xff]
    %v790 = vld [vmem:[#allocation7 + $0x190] sm:$0xff]
    %v791 = vld [vmem:[#allocation7 + $0x198] sm:$0xff]
    %v792 = vld [vmem:[#allocation7 + $0x1a0] sm:$0xff]
    %v793 = vld [vmem:[#allocation7 + $0x1a8] sm:$0xff]
    %v794 = vld [vmem:[#allocation7 + $0x1b0] sm:$0xff]
    %v795 = vld [vmem:[#allocation7 + $0x1b8] sm:$0xff]
    %v796 = vld [vmem:[#allocation7 + $0x1c0] sm:$0xff]
    %v797 = vld [vmem:[#allocation7 + $0x1c8] sm:$0xff]
    %v798 = vld [vmem:[#allocation7 + $0x1d0] sm:$0xff]
    %v799 = vld [vmem:[#allocation7 + $0x1d8] sm:$0xff]
    %v800 = vld [vmem:[#allocation7 + $0x1e0] sm:$0xff]
    %v801 = vld [vmem:[#allocation7 + $0x1e8] sm:$0xff]
    %v802 = vld [vmem:[#allocation7 + $0x1f0] sm:$0xff]
    %v803 = vld [vmem:[#allocation7 + $0x1f8] sm:$0xff]
    %v804 = vld [vmem:[%s6] sm:$0xf]
    %v806 = vlaneseq
    %v807 = vshrl.u32 %v806, 7
    %v808 = vsub.s32 0, %v807
    %v809 = vrot.slane %v804, %v808
    %v810 = vlaneseq
    %v811 = vshrl.u32 %v810, 7
    %v812 = vsub.s32 1, %v811
    %v813 = vrot.slane %v804, %v812
    %v814 = vlaneseq
    %v815 = vshrl.u32 %v814, 7
    %v816 = vsub.s32 2, %v815
    %v817 = vrot.slane %v804, %v816
    %v818 = vlaneseq
    %v819 = vshrl.u32 %v818, 7
    %v820 = vsub.s32 3, %v819
    %v821 = vrot.slane %v804, %v820
    %v890 = vunpack.c.l.b16 %v740
    %v891 = vunpack.c.h.b16 %v740
    %v892 = vunpack.c.l.b16 %v741
    %v893 = vunpack.c.h.b16 %v741
    %v894 = vunpack.c.l.b16 %v742
    %v895 = vunpack.c.h.b16 %v742
    %v896 = vunpack.c.l.b16 %v743
    %v897 = vunpack.c.h.b16 %v743
    %v898 = vunpack.c.l.b16 %v744
    %v899 = vunpack.c.h.b16 %v744
    %v900 = vunpack.c.l.b16 %v745
    %v901 = vunpack.c.h.b16 %v745
    %v902 = vunpack.c.l.b16 %v746
    %v903 = vunpack.c.h.b16 %v746
    %v904 = vunpack.c.l.b16 %v747
    %v905 = vunpack.c.h.b16 %v747
    %v906 = vunpack.c.l.b16 %v748
    %v907 = vunpack.c.h.b16 %v748
    %v908 = vunpack.c.l.b16 %v749
    %v909 = vunpack.c.h.b16 %v749
    %v910 = vunpack.c.l.b16 %v750
    %v911 = vunpack.c.h.b16 %v750
    %v912 = vunpack.c.l.b16 %v751
    %v913 = vunpack.c.h.b16 %v751
    %v914 = vunpack.c.l.b16 %v752
    %v915 = vunpack.c.h.b16 %v752
    %v916 = vunpack.c.l.b16 %v753
    %v917 = vunpack.c.h.b16 %v753
    %v918 = vunpack.c.l.b16 %v754
    %v919 = vunpack.c.h.b16 %v754
    %v920 = vunpack.c.l.b16 %v755
    %v921 = vunpack.c.h.b16 %v755
    %v922 = vunpack.c.l.b16 %v756
    %v923 = vunpack.c.h.b16 %v756
    %v924 = vunpack.c.l.b16 %v757
    %v925 = vunpack.c.h.b16 %v757
    %v926 = vunpack.c.l.b16 %v758
    %v927 = vunpack.c.h.b16 %v758
    %v928 = vunpack.c.l.b16 %v759
    %v929 = vunpack.c.h.b16 %v759
    %v930 = vunpack.c.l.b16 %v760
    %v931 = vunpack.c.h.b16 %v760
    %v932 = vunpack.c.l.b16 %v761
    %v933 = vunpack.c.h.b16 %v761
    %v934 = vunpack.c.l.b16 %v762
    %v935 = vunpack.c.h.b16 %v762
    %v936 = vunpack.c.l.b16 %v763
    %v937 = vunpack.c.h.b16 %v763
    %v938 = vunpack.c.l.b16 %v764
    %v939 = vunpack.c.h.b16 %v764
    %v940 = vunpack.c.l.b16 %v765
    %v941 = vunpack.c.h.b16 %v765
    %v942 = vunpack.c.l.b16 %v766
    %v943 = vunpack.c.h.b16 %v766
    %v944 = vunpack.c.l.b16 %v767
    %v945 = vunpack.c.h.b16 %v767
    %v946 = vunpack.c.l.b16 %v768
    %v947 = vunpack.c.h.b16 %v768
    %v948 = vunpack.c.l.b16 %v769
    %v949 = vunpack.c.h.b16 %v769
    %v950 = vunpack.c.l.b16 %v770
    %v951 = vunpack.c.h.b16 %v770
    %v952 = vunpack.c.l.b16 %v771
    %v953 = vunpack.c.h.b16 %v771
    %v954 = vunpack.c.l.b16 %v772
    %v955 = vunpack.c.h.b16 %v772
    %v956 = vunpack.c.l.b16 %v773
    %v957 = vunpack.c.h.b16 %v773
    %v958 = vunpack.c.l.b16 %v774
    %v959 = vunpack.c.h.b16 %v774
    %v960 = vunpack.c.l.b16 %v775
    %v961 = vunpack.c.h.b16 %v775
    %v962 = vunpack.c.l.b16 %v776
    %v963 = vunpack.c.h.b16 %v776
    %v964 = vunpack.c.l.b16 %v777
    %v965 = vunpack.c.h.b16 %v777
    %v966 = vunpack.c.l.b16 %v778
    %v967 = vunpack.c.h.b16 %v778
    %v968 = vunpack.c.l.b16 %v779
    %v969 = vunpack.c.h.b16 %v779
    %v970 = vunpack.c.l.b16 %v780
    %v971 = vunpack.c.h.b16 %v780
    %v972 = vunpack.c.l.b16 %v781
    %v973 = vunpack.c.h.b16 %v781
    %v974 = vunpack.c.l.b16 %v782
    %v975 = vunpack.c.h.b16 %v782
    %v976 = vunpack.c.l.b16 %v783
    %v977 = vunpack.c.h.b16 %v783
    %v978 = vunpack.c.l.b16 %v784
    %v979 = vunpack.c.h.b16 %v784
    %v980 = vunpack.c.l.b16 %v785
    %v981 = vunpack.c.h.b16 %v785
    %v982 = vunpack.c.l.b16 %v786
    %v983 = vunpack.c.h.b16 %v786
    %v984 = vunpack.c.l.b16 %v787
    %v985 = vunpack.c.h.b16 %v787
    %v986 = vunpack.c.l.b16 %v788
    %v987 = vunpack.c.h.b16 %v788
    %v988 = vunpack.c.l.b16 %v789
    %v989 = vunpack.c.h.b16 %v789
    %v990 = vunpack.c.l.b16 %v790
    %v991 = vunpack.c.h.b16 %v790
    %v992 = vunpack.c.l.b16 %v791
    %v993 = vunpack.c.h.b16 %v791
    %v994 = vunpack.c.l.b16 %v792
    %v995 = vunpack.c.h.b16 %v792
    %v996 = vunpack.c.l.b16 %v793
    %v997 = vunpack.c.h.b16 %v793
    %v998 = vunpack.c.l.b16 %v794
    %v999 = vunpack.c.h.b16 %v794
    %v1000 = vunpack.c.l.b16 %v795
    %v1001 = vunpack.c.h.b16 %v795
    %v1002 = vunpack.c.l.b16 %v796
    %v1003 = vunpack.c.h.b16 %v796
    %v1004 = vunpack.c.l.b16 %v797
    %v1005 = vunpack.c.h.b16 %v797
    %v1006 = vunpack.c.l.b16 %v798
    %v1007 = vunpack.c.h.b16 %v798
    %v1008 = vunpack.c.l.b16 %v799
    %v1009 = vunpack.c.h.b16 %v799
    %v1010 = vunpack.c.l.b16 %v800
    %v1011 = vunpack.c.h.b16 %v800
    %v1012 = vunpack.c.l.b16 %v801
    %v1013 = vunpack.c.h.b16 %v801
    %v1014 = vunpack.c.l.b16 %v802
    %v1015 = vunpack.c.h.b16 %v802
    %v1016 = vunpack.c.l.b16 %v803
    %v1017 = vunpack.c.h.b16 %v803
    %v1018 = vpack.c.b16 %v894, %v890
    %v1019 = vpack.c.b16 %v895, %v891
    %v1020 = vpack.c.b16 %v896, %v892
    %v1021 = vpack.c.b16 %v897, %v893
    %v1022 = vpack.c.b16 %v902, %v898
    %v1023 = vpack.c.b16 %v903, %v899
    %v1024 = vpack.c.b16 %v904, %v900
    %v1025 = vpack.c.b16 %v905, %v901
    %v1026 = vpack.c.b16 %v910, %v906
    %v1027 = vpack.c.b16 %v911, %v907
    %v1028 = vpack.c.b16 %v912, %v908
    %v1029 = vpack.c.b16 %v913, %v909
    %v1030 = vpack.c.b16 %v918, %v914
    %v1031 = vpack.c.b16 %v919, %v915
    %v1032 = vpack.c.b16 %v920, %v916
    %v1033 = vpack.c.b16 %v921, %v917
    %v1034 = vpack.c.b16 %v926, %v922
    %v1035 = vpack.c.b16 %v927, %v923
    %v1036 = vpack.c.b16 %v928, %v924
    %v1037 = vpack.c.b16 %v929, %v925
    %v1038 = vpack.c.b16 %v934, %v930
    %v1039 = vpack.c.b16 %v935, %v931
    %v1040 = vpack.c.b16 %v936, %v932
    %v1041 = vpack.c.b16 %v937, %v933
    %v1042 = vpack.c.b16 %v942, %v938
    %v1043 = vpack.c.b16 %v943, %v939
    %v1044 = vpack.c.b16 %v944, %v940
    %v1045 = vpack.c.b16 %v945, %v941
    %v1046 = vpack.c.b16 %v950, %v946
    %v1047 = vpack.c.b16 %v951, %v947
    %v1048 = vpack.c.b16 %v952, %v948
    %v1049 = vpack.c.b16 %v953, %v949
    %v1050 = vpack.c.b16 %v958, %v954
    %v1051 = vpack.c.b16 %v959, %v955
    %v1052 = vpack.c.b16 %v960, %v956
    %v1053 = vpack.c.b16 %v961, %v957
    %v1054 = vpack.c.b16 %v966, %v962
    %v1055 = vpack.c.b16 %v967, %v963
    %v1056 = vpack.c.b16 %v968, %v964
    %v1057 = vpack.c.b16 %v969, %v965
    %v1058 = vpack.c.b16 %v974, %v970
    %v1059 = vpack.c.b16 %v975, %v971
    %v1060 = vpack.c.b16 %v976, %v972
    %v1061 = vpack.c.b16 %v977, %v973
    %v1062 = vpack.c.b16 %v982, %v978
    %v1063 = vpack.c.b16 %v983, %v979
    %v1064 = vpack.c.b16 %v984, %v980
    %v1065 = vpack.c.b16 %v985, %v981
    %v1066 = vpack.c.b16 %v990, %v986
    %v1067 = vpack.c.b16 %v991, %v987
    %v1068 = vpack.c.b16 %v992, %v988
    %v1069 = vpack.c.b16 %v993, %v989
    %v1070 = vpack.c.b16 %v998, %v994
    %v1071 = vpack.c.b16 %v999, %v995
    %v1072 = vpack.c.b16 %v1000, %v996
    %v1073 = vpack.c.b16 %v1001, %v997
    %v1074 = vpack.c.b16 %v1006, %v1002
    %v1075 = vpack.c.b16 %v1007, %v1003
    %v1076 = vpack.c.b16 %v1008, %v1004
    %v1077 = vpack.c.b16 %v1009, %v1005
    %v1078 = vpack.c.b16 %v1014, %v1010
    %v1079 = vpack.c.b16 %v1015, %v1011
    %v1080 = vpack.c.b16 %v1016, %v1012
    %v1081 = vpack.c.b16 %v1017, %v1013
    %1146 = vmatprep.subr.bf16.mxu0 %v1019
    %1147 = vmatpush1.bf16.msra.mxu0 %v1018
    %1148 = vmatprep.subr.bf16.mxu0 %v1023
    %1149 = vmatpush1.bf16.msra.mxu0 %v1022
    %1150 = vmatprep.subr.bf16.mxu0 %v1027
    %1151 = vmatpush1.bf16.msra.mxu0 %v1026
    %1152 = vmatprep.subr.bf16.mxu0 %v1031
    %1153 = vmatpush1.bf16.msra.mxu0 %v1030
    %1154 = vmatprep.subr.bf16.mxu0 %v1035
    %1155 = vmatpush1.bf16.msra.mxu0 %v1034
    %1156 = vmatprep.subr.bf16.mxu0 %v1039
    %1157 = vmatpush1.bf16.msra.mxu0 %v1038
    %1158 = vmatprep.subr.bf16.mxu0 %v1043
    %1159 = vmatpush1.bf16.msra.mxu0 %v1042
    %1160 = vmatprep.subr.bf16.mxu0 %v1047
    %1161 = vmatpush1.bf16.msra.mxu0 %v1046
    %1162 = vmatprep.subr.bf16.mxu0 %v1051
    %1163 = vmatpush1.bf16.msra.mxu0 %v1050
    %1164 = vmatprep.subr.bf16.mxu0 %v1055
    %1165 = vmatpush1.bf16.msra.mxu0 %v1054
    %1166 = vmatprep.subr.bf16.mxu0 %v1059
    %1167 = vmatpush1.bf16.msra.mxu0 %v1058
    %1168 = vmatprep.subr.bf16.mxu0 %v1063
    %1169 = vmatpush1.bf16.msra.mxu0 %v1062
    %1170 = vmatprep.subr.bf16.mxu0 %v1067
    %1171 = vmatpush1.bf16.msra.mxu0 %v1066
    %1172 = vmatprep.subr.bf16.mxu0 %v1071
    %1173 = vmatpush1.bf16.msra.mxu0 %v1070
    %1174 = vmatprep.subr.bf16.mxu0 %v1075
    %1175 = vmatpush1.bf16.msra.mxu0 %v1074
    %1176 = vmatprep.subr.bf16.mxu0 %v1079
    %1177 = vmatpush1.bf16.msra.mxu0 %v1078
    %1178 = vmatprep.mubr.bf16.mxu0 %v739
    %1179 = vmatmul.mubr.bf16.gmra.mrb[0].mxu0 %v738
    %v1180 = vpop.f32.mrb[0].mxu0
    %v1181 = vadd.f32 %v809, %v1180
    %v1182 = vpop.f32.mrb[0].mxu0
    %v1183 = vadd.f32 %v813, %v1182
    %v1184 = vpop.f32.mrb[0].mxu0
    %v1185 = vadd.f32 %v809, %v1184
    %v1186 = vpop.f32.mrb[0].mxu0
    %v1187 = vadd.f32 %v813, %v1186
    %1188 = vdwg.mxu0
    %1189 = vmatprep.subr.bf16.mxu0 %v1021
    %1190 = vmatpush1.bf16.msra.mxu0 %v1020
    %1191 = vmatprep.subr.bf16.mxu0 %v1025
    %1192 = vmatpush1.bf16.msra.mxu0 %v1024
    %1193 = vmatprep.subr.bf16.mxu0 %v1029
    %1194 = vmatpush1.bf16.msra.mxu0 %v1028
    %1195 = vmatprep.subr.bf16.mxu0 %v1033
    %1196 = vmatpush1.bf16.msra.mxu0 %v1032
    %1197 = vmatprep.subr.bf16.mxu0 %v1037
    %1198 = vmatpush1.bf16.msra.mxu0 %v1036
    %1199 = vmatprep.subr.bf16.mxu0 %v1041
    %1200 = vmatpush1.bf16.msra.mxu0 %v1040
    %1201 = vmatprep.subr.bf16.mxu0 %v1045
    %1202 = vmatpush1.bf16.msra.mxu0 %v1044
    %1203 = vmatprep.subr.bf16.mxu0 %v1049
    %1204 = vmatpush1.bf16.msra.mxu0 %v1048
    %1205 = vmatprep.subr.bf16.mxu0 %v1053
    %1206 = vmatpush1.bf16.msra.mxu0 %v1052
    %1207 = vmatprep.subr.bf16.mxu0 %v1057
    %1208 = vmatpush1.bf16.msra.mxu0 %v1056
    %1209 = vmatprep.subr.bf16.mxu0 %v1061
    %1210 = vmatpush1.bf16.msra.mxu0 %v1060
    %1211 = vmatprep.subr.bf16.mxu0 %v1065
    %1212 = vmatpush1.bf16.msra.mxu0 %v1064
    %1213 = vmatprep.subr.bf16.mxu0 %v1069
    %1214 = vmatpush1.bf16.msra.mxu0 %v1068
    %1215 = vmatprep.subr.bf16.mxu0 %v1073
    %1216 = vmatpush1.bf16.msra.mxu0 %v1072
    %1217 = vmatprep.subr.bf16.mxu0 %v1077
    %1218 = vmatpush1.bf16.msra.mxu0 %v1076
    %1219 = vmatprep.subr.bf16.mxu0 %v1081
    %1220 = vmatpush1.bf16.msra.mxu0 %v1080
    %1221 = vmatprep.mubr.bf16.mxu0 %v739
    %1222 = vmatmul.mubr.bf16.gmra.mrb[0].mxu0 %v738
    %v1223 = vpop.f32.mrb[0].mxu0
    %v1224 = vadd.f32 %v817, %v1223
    %v1225 = vpop.f32.mrb[0].mxu0
    %v1226 = vadd.f32 %v821, %v1225
    %v1227 = vpop.f32.mrb[0].mxu0
    %v1228 = vadd.f32 %v817, %v1227
    %v1229 = vpop.f32.mrb[0].mxu0
    %v1230 = vadd.f32 %v821, %v1229
    %1231 = vdwg.mxu0
    %v1232 = vmax.f32 %v1181, 0.0
    %v1233 = vmax.f32 %v1183, 0.0
    %v1234 = vmax.f32 %v1224, 0.0
    %v1235 = vmax.f32 %v1226, 0.0
    %v1236 = vmax.f32 %v1185, 0.0
    %v1237 = vmax.f32 %v1187, 0.0
    %v1238 = vmax.f32 %v1228, 0.0
    %v1239 = vmax.f32 %v1230, 0.0
    %v1240 = vpack.c.bf16 %v1236, %v1232
    %v1241 = vpack.c.bf16 %v1237, %v1233
    %v1242 = vpack.c.bf16 %v1238, %v1234
    %v1243 = vpack.c.bf16 %v1239, %v1235
    %v1244 = vld [vmem:[#allocation9] sm:$0xf]
    %v1245 = vld [vmem:[#allocation9 + $0x4] sm:$0xf]
    %v1246 = vld [vmem:[#allocation9 + $0x8] sm:$0xf]
    %v1247 = vld [vmem:[#allocation9 + $0xc] sm:$0xf]
    %v1248 = vld [vmem:[#allocation9 + $0x10] sm:$0xf]
    %v1249 = vld [vmem:[#allocation9 + $0x14] sm:$0xf]
    %v1250 = vld [vmem:[#allocation9 + $0x18] sm:$0xf]
    %v1251 = vld [vmem:[#allocation9 + $0x1c] sm:$0xf]
    %v1252 = vld [vmem:[#allocation9 + $0x20] sm:$0xf]
    %v1253 = vld [vmem:[#allocation9 + $0x24] sm:$0xf]
    %v1254 = vld [vmem:[#allocation9 + $0x28] sm:$0xf]
    %v1255 = vld [vmem:[#allocation9 + $0x2c] sm:$0xf]
    %v1256 = vld [vmem:[#allocation9 + $0x30] sm:$0xf]
    %v1257 = vld [vmem:[#allocation9 + $0x34] sm:$0xf]
    %v1258 = vld [vmem:[#allocation9 + $0x38] sm:$0xf]
    %v1259 = vld [vmem:[#allocation9 + $0x3c] sm:$0xf]
    %v1260 = vld [vmem:[#allocation9 + $0x40] sm:$0xf]
    %v1261 = vld [vmem:[#allocation9 + $0x44] sm:$0xf]
    %v1262 = vld [vmem:[#allocation9 + $0x48] sm:$0xf]
    %v1263 = vld [vmem:[#allocation9 + $0x4c] sm:$0xf]
    %v1264 = vld [vmem:[#allocation9 + $0x50] sm:$0xf]
    %v1265 = vld [vmem:[#allocation9 + $0x54] sm:$0xf]
    %v1266 = vld [vmem:[#allocation9 + $0x58] sm:$0xf]
    %v1267 = vld [vmem:[#allocation9 + $0x5c] sm:$0xf]
    %v1268 = vld [vmem:[#allocation9 + $0x60] sm:$0xf]
    %v1269 = vld [vmem:[#allocation9 + $0x64] sm:$0xf]
    %v1270 = vld [vmem:[#allocation9 + $0x68] sm:$0xf]
    %v1271 = vld [vmem:[#allocation9 + $0x6c] sm:$0xf]
    %v1272 = vld [vmem:[#allocation9 + $0x70] sm:$0xf]
    %v1273 = vld [vmem:[#allocation9 + $0x74] sm:$0xf]
    %v1274 = vld [vmem:[#allocation9 + $0x78] sm:$0xf]
    %v1275 = vld [vmem:[#allocation9 + $0x7c] sm:$0xf]
    %v1276 = vld [vmem:[#allocation9 + $0x80] sm:$0xf]
    %v1277 = vld [vmem:[#allocation9 + $0x84] sm:$0xf]
    %v1278 = vld [vmem:[#allocation9 + $0x88] sm:$0xf]
    %v1279 = vld [vmem:[#allocation9 + $0x8c] sm:$0xf]
    %v1280 = vld [vmem:[#allocation9 + $0x90] sm:$0xf]
    %v1281 = vld [vmem:[#allocation9 + $0x94] sm:$0xf]
    %v1282 = vld [vmem:[#allocation9 + $0x98] sm:$0xf]
    %v1283 = vld [vmem:[#allocation9 + $0x9c] sm:$0xf]
    %v1284 = vld [vmem:[#allocation9 + $0xa0] sm:$0xf]
    %v1285 = vld [vmem:[#allocation9 + $0xa4] sm:$0xf]
    %v1286 = vld [vmem:[#allocation9 + $0xa8] sm:$0xf]
    %v1287 = vld [vmem:[#allocation9 + $0xac] sm:$0xf]
    %v1288 = vld [vmem:[#allocation9 + $0xb0] sm:$0xf]
    %v1289 = vld [vmem:[#allocation9 + $0xb4] sm:$0xf]
    %v1290 = vld [vmem:[#allocation9 + $0xb8] sm:$0xf]
    %v1291 = vld [vmem:[#allocation9 + $0xbc] sm:$0xf]
    %v1292 = vld [vmem:[#allocation9 + $0xc0] sm:$0xf]
    %v1293 = vld [vmem:[#allocation9 + $0xc4] sm:$0xf]
    %v1294 = vld [vmem:[#allocation9 + $0xc8] sm:$0xf]
    %v1295 = vld [vmem:[#allocation9 + $0xcc] sm:$0xf]
    %v1296 = vld [vmem:[#allocation9 + $0xd0] sm:$0xf]
    %v1297 = vld [vmem:[#allocation9 + $0xd4] sm:$0xf]
    %v1298 = vld [vmem:[#allocation9 + $0xd8] sm:$0xf]
    %v1299 = vld [vmem:[#allocation9 + $0xdc] sm:$0xf]
    %v1300 = vld [vmem:[#allocation9 + $0xe0] sm:$0xf]
    %v1301 = vld [vmem:[#allocation9 + $0xe4] sm:$0xf]
    %v1302 = vld [vmem:[#allocation9 + $0xe8] sm:$0xf]
    %v1303 = vld [vmem:[#allocation9 + $0xec] sm:$0xf]
    %v1304 = vld [vmem:[#allocation9 + $0xf0] sm:$0xf]
    %v1305 = vld [vmem:[#allocation9 + $0xf4] sm:$0xf]
    %v1306 = vld [vmem:[#allocation9 + $0xf8] sm:$0xf]
    %v1307 = vld [vmem:[#allocation9 + $0xfc] sm:$0xf]
    %v1308 = vld [vmem:[%s8] sm:$0x1]
    %v1310 = vlaneseq
    %v1311 = vshrl.u32 %v1310, 7
    %v1312 = vsub.s32 0, %v1311
    %v1313 = vrot.slane %v1308, %v1312
    %v1379 = vunpack.c.l.b16 %v1244
    %v1380 = vunpack.c.l.b16 %v1245
    %v1381 = vunpack.c.l.b16 %v1246
    %v1382 = vunpack.c.l.b16 %v1247
    %v1383 = vunpack.c.l.b16 %v1248
    %v1384 = vunpack.c.l.b16 %v1249
    %v1385 = vunpack.c.l.b16 %v1250
    %v1386 = vunpack.c.l.b16 %v1251
    %v1387 = vunpack.c.l.b16 %v1252
    %v1388 = vunpack.c.l.b16 %v1253
    %v1389 = vunpack.c.l.b16 %v1254
    %v1390 = vunpack.c.l.b16 %v1255
    %v1391 = vunpack.c.l.b16 %v1256
    %v1392 = vunpack.c.l.b16 %v1257
    %v1393 = vunpack.c.l.b16 %v1258
    %v1394 = vunpack.c.l.b16 %v1259
    %v1395 = vunpack.c.l.b16 %v1260
    %v1396 = vunpack.c.l.b16 %v1261
    %v1397 = vunpack.c.l.b16 %v1262
    %v1398 = vunpack.c.l.b16 %v1263
    %v1399 = vunpack.c.l.b16 %v1264
    %v1400 = vunpack.c.l.b16 %v1265
    %v1401 = vunpack.c.l.b16 %v1266
    %v1402 = vunpack.c.l.b16 %v1267
    %v1403 = vunpack.c.l.b16 %v1268
    %v1404 = vunpack.c.l.b16 %v1269
    %v1405 = vunpack.c.l.b16 %v1270
    %v1406 = vunpack.c.l.b16 %v1271
    %v1407 = vunpack.c.l.b16 %v1272
    %v1408 = vunpack.c.l.b16 %v1273
    %v1409 = vunpack.c.l.b16 %v1274
    %v1410 = vunpack.c.l.b16 %v1275
    %v1411 = vunpack.c.l.b16 %v1276
    %v1412 = vunpack.c.l.b16 %v1277
    %v1413 = vunpack.c.l.b16 %v1278
    %v1414 = vunpack.c.l.b16 %v1279
    %v1415 = vunpack.c.l.b16 %v1280
    %v1416 = vunpack.c.l.b16 %v1281
    %v1417 = vunpack.c.l.b16 %v1282
    %v1418 = vunpack.c.l.b16 %v1283
    %v1419 = vunpack.c.l.b16 %v1284
    %v1420 = vunpack.c.l.b16 %v1285
    %v1421 = vunpack.c.l.b16 %v1286
    %v1422 = vunpack.c.l.b16 %v1287
    %v1423 = vunpack.c.l.b16 %v1288
    %v1424 = vunpack.c.l.b16 %v1289
    %v1425 = vunpack.c.l.b16 %v1290
    %v1426 = vunpack.c.l.b16 %v1291
    %v1427 = vunpack.c.l.b16 %v1292
    %v1428 = vunpack.c.l.b16 %v1293
    %v1429 = vunpack.c.l.b16 %v1294
    %v1430 = vunpack.c.l.b16 %v1295
    %v1431 = vunpack.c.l.b16 %v1296
    %v1432 = vunpack.c.l.b16 %v1297
    %v1433 = vunpack.c.l.b16 %v1298
    %v1434 = vunpack.c.l.b16 %v1299
    %v1435 = vunpack.c.l.b16 %v1300
    %v1436 = vunpack.c.l.b16 %v1301
    %v1437 = vunpack.c.l.b16 %v1302
    %v1438 = vunpack.c.l.b16 %v1303
    %v1439 = vunpack.c.l.b16 %v1304
    %v1440 = vunpack.c.l.b16 %v1305
    %v1441 = vunpack.c.l.b16 %v1306
    %v1442 = vunpack.c.l.b16 %v1307
    %v1443 = vpack.c.b16 %v1380, %v1379
    %v1444 = vpack.c.b16 %v1382, %v1381
    %v1445 = vpack.c.b16 %v1384, %v1383
    %v1446 = vpack.c.b16 %v1386, %v1385
    %v1447 = vpack.c.b16 %v1388, %v1387
    %v1448 = vpack.c.b16 %v1390, %v1389
    %v1449 = vpack.c.b16 %v1392, %v1391
    %v1450 = vpack.c.b16 %v1394, %v1393
    %v1451 = vpack.c.b16 %v1396, %v1395
    %v1452 = vpack.c.b16 %v1398, %v1397
    %v1453 = vpack.c.b16 %v1400, %v1399
    %v1454 = vpack.c.b16 %v1402, %v1401
    %v1455 = vpack.c.b16 %v1404, %v1403
    %v1456 = vpack.c.b16 %v1406, %v1405
    %v1457 = vpack.c.b16 %v1408, %v1407
    %v1458 = vpack.c.b16 %v1410, %v1409
    %v1459 = vpack.c.b16 %v1412, %v1411
    %v1460 = vpack.c.b16 %v1414, %v1413
    %v1461 = vpack.c.b16 %v1416, %v1415
    %v1462 = vpack.c.b16 %v1418, %v1417
    %v1463 = vpack.c.b16 %v1420, %v1419
    %v1464 = vpack.c.b16 %v1422, %v1421
    %v1465 = vpack.c.b16 %v1424, %v1423
    %v1466 = vpack.c.b16 %v1426, %v1425
    %v1467 = vpack.c.b16 %v1428, %v1427
    %v1468 = vpack.c.b16 %v1430, %v1429
    %v1469 = vpack.c.b16 %v1432, %v1431
    %v1470 = vpack.c.b16 %v1434, %v1433
    %v1471 = vpack.c.b16 %v1436, %v1435
    %v1472 = vpack.c.b16 %v1438, %v1437
    %v1473 = vpack.c.b16 %v1440, %v1439
    %v1474 = vpack.c.b16 %v1442, %v1441
    %1507 = vmatprep.subr.bf16.mxu0 0
    %1508 = vmatpush1.bf16.msra.mxu0 %v1443
    %1509 = vmatprep.subr.bf16.mxu0 0
    %1510 = vmatpush1.bf16.msra.mxu0 %v1444
    %1511 = vmatprep.subr.bf16.mxu0 0
    %1512 = vmatpush1.bf16.msra.mxu0 %v1445
    %1513 = vmatprep.subr.bf16.mxu0 0
    %1514 = vmatpush1.bf16.msra.mxu0 %v1446
    %1515 = vmatprep.subr.bf16.mxu0 0
    %1516 = vmatpush1.bf16.msra.mxu0 %v1447
    %1517 = vmatprep.subr.bf16.mxu0 0
    %1518 = vmatpush1.bf16.msra.mxu0 %v1448
    %1519 = vmatprep.subr.bf16.mxu0 0
    %1520 = vmatpush1.bf16.msra.mxu0 %v1449
    %1521 = vmatprep.subr.bf16.mxu0 0
    %1522 = vmatpush1.bf16.msra.mxu0 %v1450
    %1523 = vmatprep.subr.bf16.mxu0 0
    %1524 = vmatpush1.bf16.msra.mxu0 %v1451
    %1525 = vmatprep.subr.bf16.mxu0 0
    %1526 = vmatpush1.bf16.msra.mxu0 %v1452
    %1527 = vmatprep.subr.bf16.mxu0 0
    %1528 = vmatpush1.bf16.msra.mxu0 %v1453
    %1529 = vmatprep.subr.bf16.mxu0 0
    %1530 = vmatpush1.bf16.msra.mxu0 %v1454
    %1531 = vmatprep.subr.bf16.mxu0 0
    %1532 = vmatpush1.bf16.msra.mxu0 %v1455
    %1533 = vmatprep.subr.bf16.mxu0 0
    %1534 = vmatpush1.bf16.msra.mxu0 %v1456
    %1535 = vmatprep.subr.bf16.mxu0 0
    %1536 = vmatpush1.bf16.msra.mxu0 %v1457
    %1537 = vmatprep.subr.bf16.mxu0 0
    %1538 = vmatpush1.bf16.msra.mxu0 %v1458
    %1539 = vmatprep.mubr.bf16.mxu0 %v1241
    %1540 = vmatmul.mubr.bf16.gmra.mrb[0].mxu0 %v1240
    %v1541 = vpop.f32.mrb[0].mxu0
    %v1542 = vadd.f32 %v1313, %v1541
    %v1543 = vpop.f32.mrb[0].mxu0
    %v1544 = vpop.f32.mrb[0].mxu0
    %v1545 = vadd.f32 %v1313, %v1544
    %v1546 = vpop.f32.mrb[0].mxu0
    %1547 = vdwg.mxu0
    %1548 = vmatprep.subr.bf16.mxu0 0
    %1549 = vmatpush1.bf16.msra.mxu0 %v1459
    %1550 = vmatprep.subr.bf16.mxu0 0
    %1551 = vmatpush1.bf16.msra.mxu0 %v1460
    %1552 = vmatprep.subr.bf16.mxu0 0
    %1553 = vmatpush1.bf16.msra.mxu0 %v1461
    %1554 = vmatprep.subr.bf16.mxu0 0
    %1555 = vmatpush1.bf16.msra.mxu0 %v1462
    %1556 = vmatprep.subr.bf16.mxu0 0
    %1557 = vmatpush1.bf16.msra.mxu0 %v1463
    %1558 = vmatprep.subr.bf16.mxu0 0
    %1559 = vmatpush1.bf16.msra.mxu0 %v1464
    %1560 = vmatprep.subr.bf16.mxu0 0
    %1561 = vmatpush1.bf16.msra.mxu0 %v1465
    %1562 = vmatprep.subr.bf16.mxu0 0
    %1563 = vmatpush1.bf16.msra.mxu0 %v1466
    %1564 = vmatprep.subr.bf16.mxu0 0
    %1565 = vmatpush1.bf16.msra.mxu0 %v1467
    %1566 = vmatprep.subr.bf16.mxu0 0
    %1567 = vmatpush1.bf16.msra.mxu0 %v1468
    %1568 = vmatprep.subr.bf16.mxu0 0
    %1569 = vmatpush1.bf16.msra.mxu0 %v1469
    %1570 = vmatprep.subr.bf16.mxu0 0
    %1571 = vmatpush1.bf16.msra.mxu0 %v1470
    %1572 = vmatprep.subr.bf16.mxu0 0
    %1573 = vmatpush1.bf16.msra.mxu0 %v1471
    %1574 = vmatprep.subr.bf16.mxu0 0
    %1575 = vmatpush1.bf16.msra.mxu0 %v1472
    %1576 = vmatprep.subr.bf16.mxu0 0
    %1577 = vmatpush1.bf16.msra.mxu0 %v1473
    %1578 = vmatprep.subr.bf16.mxu0 0
    %1579 = vmatpush1.bf16.msra.mxu0 %v1474
    %1580 = vmatprep.mubr.bf16.mxu0 %v1243
    %1581 = vmatmul.mubr.bf16.gmra.mrb[0].mxu0 %v1242
    %v1582 = vpop.f32.mrb[0].mxu0
    %v1583 = vadd.f32 %v1542, %v1582
    %v1584 = vpop.f32.mrb[0].mxu0
    %v1585 = vpop.f32.mrb[0].mxu0
    %v1586 = vadd.f32 %v1545, %v1585
    %v1587 = vpop.f32.mrb[0].mxu0
    %1588 = vdwg.mxu0
    %v1589 = vlaneseq
    %v1590 = vand.u32 %v1589, 127
    %vm1591 = vcmp.ge.s32.totalorder %v1590, 4
    %vm1592 = vcmp.lt.s32.totalorder %v1590, 8
    %vm1593 = vmand %vm1591, %vm1592
    %v1594 = vmax.f32 %v1583, 0.0
    %v1595 = vmax.f32 %v1586, 0.0
    %v1596 = vand.u32 2147483647, %v1583
    %v1597 = vand.u32 2147483647, %v1586
    %v1598 = vsub.f32 0.0, %v1596
    %v1599 = vsub.f32 0.0, %v1597
    %v1600 = vmul.f32 %v1598, 1.442695
    %v1601 = vpow.pop %v1600
    %v1602 = vmul.f32 %v1599, 1.442695
    %v1603 = vpow.pop %v1602
    %v1604 = vadd.f32 %v1601, 1.0
    %v1605 = vadd.f32 %v1603, 1.0
    %v1606 = vlog2.pop %v1604
    %v1607 = vmul.f32 %v1606, 0.6931472
    %v1608 = vlog2.pop %v1605
    %v1609 = vmul.f32 %v1608, 0.6931472
    %v1610 = vadd.f32 %v1594, %v1607
    %v1611 = vadd.f32 %v1595, %v1609
    %v1612 = vsel %vm1593, %v1610, %v1583
    %v1613 = vsel %vm1593, %v1611, %v1586
    %1614 = vst [vmem:[%s9] sm:$0xff] %v1612
    %1615 = vst [vmem:[%s9 + $0x8] sm:$0xff] %v1613
    // Predicated region
    $region58: #{_ff_shared_forward_2d.1} parent=1 // pred_check
      _
    $region59: #{_ff_shared_forward_2d.1} parent=1 // pred_check_branch
      %1617 = sbr.rel (0) target = $region61
    $region60: #{_ff_shared_forward_2d.1} parent=1 // pred_region
      _
    $region61: #{_ff_shared_forward_2d.1} parent=1 // pred_fallthru
      _
    // Predicated region
    $region62: #{_ff_shared_forward_2d.1} parent=1 // pred_check
      _
    $region63: #{_ff_shared_forward_2d.1} parent=1 // pred_check_branch
      %1619 = sbr.rel (0) target = $region65
    $region64: #{_ff_shared_forward_2d.1} parent=1 // pred_region
      _
    $region65: #{_ff_shared_forward_2d.1} parent=1 // pred_fallthru
      _
    %1620 = vsyncpa [#allocation3], 1
    %1621 = vsyncpa [#allocation5], 1
    %1622 = vsyncpa [#allocation8], 1

</llo_original>
